<compile_context>
chip_gen: v7x
topology: tpu7x:2x2x1
jax: 0.10.0
libtpu: 0.0.40
codegen_flags: <defaults>
</compile_context>

<pallas_src>
import itertools
import math

import jax
import jax.numpy as jnp
from jax.experimental import pallas as pl
from jax.experimental.pallas import tpu as pltpu

_VMEM_LIMIT = 32 * 1024 * 1024  # fits v7x (64 MiB physical) as well as v6e/v5e


# ----------------------------------------------------------------------------
# Pure-Python equivariant-contraction enumeration, ported verbatim from
# util/perm_inv.py (setup-time glue; no torch, no file cache, no prints).
# ----------------------------------------------------------------------------
known_contractions = {}


def adj(v, r):
    K = len(v)
    code = [[[] for o2 in range(K)] for o1 in range(K)]
    for o1 in range(K):
        for o2 in range(K):
            i = 0
            for n in r:
                for j in range(i, i + n):
                    code[o1][o2] += [int(v[o1][j] == v[o2][k]) for k in range(i, i + n)]
                i += n
    for o1 in range(K):
        for o2 in range(K):
            code[o1][o2] = tuple(code[o1][o2])
    return code


def coloring(N):
    if N == 1:
        return [[0]]
    v = coloring(N - 1)
    out = []
    for x in v:
        out += [x + [i] for i in range(max(x) + 2)]
    return out


def contractions(r, orders=[1]):
    if (tuple(r), tuple(orders)) in known_contractions:
        return known_contractions[tuple(r), tuple(orders)]
    if len(r) == 1:
        n = r[0]
        order = sum(orders)
        v = coloring(n * order)
        comps = [[x[i * n:(i + 1) * n] for i in range(order)] for x in v]
    else:
        prev = contractions(r[:-1], orders)
        order = sum(orders)
        v = coloring(r[-1] * order)
        n = r[-1]
        comps = []
        for x in prev:
            for y in v:
                comps.append([x[i] + y[i * n:(i + 1) * n] for i in range(order)])
    i = 0
    perms = []
    for order in orders:
        perm_i = list(itertools.permutations(range(i, i + order)))
        i += order
        perms.append(perm_i)
    perms = list(itertools.product(*perms))
    perms = [list(itertools.chain(*x)) for x in perms]
    comps_by_code = {}
    for c in comps:
        A = adj(c, r)
        k = []
        for ind in perms:
            x = [[A[i][j] for j in ind] for i in ind]
            x = tuple([tuple(row) for row in x])
            k.append(x)
        k = frozenset(k)
        if k not in comps_by_code:
            comps_by_code[k] = c
    out = [comps_by_code[k] for k in comps_by_code]
    known_contractions[tuple(r), tuple(orders)] = out
    return out


def powerset(iterable):
    xs = list(iterable)
    return list(itertools.chain.from_iterable(
        (itertools.combinations(xs, n) for n in range(1, len(xs)))))


def filter_breakable_equivariance(comps, r, orders):
    filtered = []
    for c in comps:
        i = 0
        breakable = False
        for n in orders:
            full = set(list(range(i, i + n)))
            layers_x = powerset(range(i, i + n))
            layers_y = [[x for x in full if x not in v] for v in layers_x]
            for l in range(len(layers_x)):
                j = 0
                breakable_l = True
                for m in r:
                    idx_x = set(list(itertools.chain.from_iterable(
                        [c[x][j:j + m] for x in layers_x[l]] + [c[-1][j:j + m]])))
                    idx_x2 = set(list(itertools.chain.from_iterable(
                        [c[x][j:j + m] for x in layers_x[l]])))
                    idx_y = set(list(itertools.chain.from_iterable(
                        [c[x][j:j + m] for x in layers_y[l]] + [c[-1][j:j + m]])))
                    if not (len(idx_x.intersection(idx_y)) <= m or
                            (len(layers_x[l]) > 1 and len(idx_x2.intersection(idx_y)) <= m)):
                        breakable_l = False
                        break
                    j += m
                if breakable_l:
                    breakable = True
                    break
            i += n
            if breakable:
                break
        if not breakable:
            filtered.append(c)
    return filtered


def filter_dependency(comps, r, deps):
    filtered = []
    for c in comps:
        passed = True
        for e in deps:
            s0 = sum(r[:e[0]]); s1 = s0 + r[e[0]]
            t0 = sum(r[:e[1]]); t1 = t0 + r[e[1]]
            for o1 in range(len(c)):
                for o2 in range(o1 + 1, len(c)):
                    if not c[o1][s0:s1] == c[o2][s0:s1]:
                        if len(set(c[o1][t0:t1]).intersection(set(c[o2][t0:t1]))) > 0:
                            passed = False
                            break
                if not passed:
                    break
            if not passed:
                break
        if passed:
            filtered.append(c)
    return filtered


def equivariance_terms(form='X_Bab', order=1, deps=()):
    s = form.split('_')[1]
    ch = sorted(list(set([c_ for c_ in s if c_.islower()])))
    r = [s.count(c_) for c_ in ch]
    deps_ = []
    for x in deps:
        v = x.split('-')
        deps_.append((ch.index(v[0][0]), ch.index(v[1][1])))
    comps = []
    for o in range(1, order + 1):
        comps_i = contractions(r, [o, 1])
        comps_i = filter_breakable_equivariance(comps_i, r, [o])
        comps_i = filter_dependency(comps_i, r, deps_)
        comps += comps_i
    lower = 'abcdefghijklmnopqrstuvwxyz'
    upper = 'ZYXWVUTSRQPONMLKJIHGFEDCBA'
    eqs = []
    for c in comps:
        node_map = {}
        for i in range(len(r)):
            for j in range(len(c)):
                for k in range(sum(r[:i]), sum(r[:i + 1])):
                    node_map[i, j, k - sum(r[:i])] = (i, c[j][k])
        id_map = sorted(list(set([node_map[x] for x in node_map])))
        id_map2 = [cc for cc in s if cc.isupper()]
        terms = []
        for i in range(len(c)):
            t = []
            for j, cc in enumerate(s):
                if cc.islower():
                    iid = s[:j + 1].count(cc) - 1
                    node = ch.index(cc)
                    iid = id_map.index(node_map[node, i, iid])
                    t.append(lower[iid])
                else:
                    iid = id_map2.index(cc)
                    t.append(upper[iid])
            terms.append(''.join(t))
        lhs = ','.join(terms[:-1])
        rhs = terms[-1]
        eqs.append(lhs + '->' + rhs)
    return eqs


def parse_eq(eq):
    """Parse 'Zab,Zcb->Zad' (form X_Bab) into per-operand (a_tag, b_tag) tags.
    Tag 'o' = tied to the output index of that slot; otherwise a free class."""
    lhs, rhs = eq.split('->')
    out_a, out_b = rhs[1], rhs[2]
    plan = []
    for t in lhs.split(','):
        plan.append(('o' if t[1] == out_a else t[1],
                     'o' if t[2] == out_b else t[2]))
    return tuple(plan)


# ----------------------------------------------------------------------------
# Symbolic per-term spec: factor each pooled term into
#   (full (N,H)) * (row (1,H)) * (col (N,1)) * (scalar (1,1)) / den
# so the kernel can exploit the rank structure.  The tokens are evaluated
# (with memoization) inside the kernel.
# ----------------------------------------------------------------------------
def _term_spec(plan):
    fulls, rows, cols, scals, den = [], [], [], [], []
    if len(plan) == 1:
        (a, b), = plan
        if a == 'o' and b == 'o':
            fulls.append('Y'); den = ['m']
        elif a == 'o':
            cols.append('rowsum'); den = ['m', 'H']
        elif b == 'o':
            rows.append('colsum'); den = ['S']
        else:
            scals.append('total'); den = ['S', 'H']
    elif len(plan) == 2:
        (a1, b1), (a2, b2) = plan
        a_shared = (a1 != 'o') and (a1 == a2)
        b_shared = (b1 != 'o') and (b1 == b2)
        if a_shared and b_shared:
            scals.append('qab'); den = ['S2', 'H']
        elif a_shared:
            tok = ('qa',) + tuple(sorted((b1 == 'o', b2 == 'o'), reverse=True))
            (rows if (b1 == 'o' or b2 == 'o') else scals).append(tok)
            den = ['S2'] + ['H'] * int(b1 != 'o') + ['H'] * int(b2 != 'o')
        elif b_shared:
            tok = ('qb',) + tuple(sorted((a1 == 'o', a2 == 'o'), reverse=True))
            (cols if (a1 == 'o' or a2 == 'o') else scals).append(tok)
            den = ['H', 'm' if a1 == 'o' else 'S', 'm' if a2 == 'o' else 'S']
        else:
            for (a, b) in plan:
                if a == 'o' and b == 'o':
                    fulls.append('Y'); den.append('m')
                elif a == 'o':
                    cols.append('rowsum'); den += ['m', 'H']
                elif b == 'o':
                    rows.append('colsum'); den.append('S')
                else:
                    scals.append('total'); den += ['S', 'H']
    else:
        # TODO(synk): pool order > 2 (3+ operand contractions) not implemented in-kernel.
        raise NotImplementedError("einpool order > 2 not supported by this kernel")
    den = tuple(sorted(den))
    cat = 'full' if fulls else ('row' if rows else 'cs')
    return {'full': fulls, 'row': rows, 'col': cols, 'scal': scals,
            'den': den, 'den_is_col': ('m' in den), 'cat': cat}


# ----------------------------------------------------------------------------
# In-kernel math helpers.
# ----------------------------------------------------------------------------
def _gelu(x):
    # tanh-approximate GELU: the transcendental goes to the otherwise-idle EUP
    # slot instead of ~15 fp32 VALU ops + a divide (review item).
    # TODO(synk): torch's default F.gelu is exact-erf; max abs deviation ~3e-3.
    c = 0.7978845608028654  # sqrt(2/pi)
    return 0.5 * x * (1.0 + jnp.tanh(c * (x + 0.044715 * x * x * x)))


def _round_up(x, m):
    return (x + m - 1) // m * m


# ----------------------------------------------------------------------------
# t0 MLP kernel (rows of (R, Fin)) — bf16 matmuls, fp32 accumulation, bf16 out.
# ----------------------------------------------------------------------------
def mlp_forward(x, weights):
    R, Fin = x.shape
    nlayers = len(weights)
    Fout = weights[-1][0].shape[1]

    # Large row tiles amortize the ~0.35us per-grid-step overhead (review item).
    TM = 512 if R >= 512 else _round_up(R, 8)
    Rp = _round_up(R, TM)
    xp = x if Rp == R else jnp.pad(x, ((0, Rp - R), (0, 0)))

    wargs, wspecs, w_bytes = [], [], 0
    for (W, b) in weights:
        wargs += [W.astype(jnp.bfloat16), b]
        wspecs += [pl.BlockSpec(W.shape, lambda i: (0, 0)),
                   pl.BlockSpec(b.shape, lambda i: (0, 0))]
        w_bytes += W.size * 2 + b.size * 4

    def kernel(x_ref, *rest):
        wrefs, o_ref = rest[:-1], rest[-1]
        h = x_ref[...]
        for li in range(nlayers):
            W = wrefs[2 * li][...]
            bvec = wrefs[2 * li + 1][...]
            h = jnp.dot(h.astype(W.dtype), W, preferred_element_type=jnp.float32) + bvec
            if li < nlayers - 1:
                h = _gelu(h)
        o_ref[...] = h.astype(o_ref.dtype)

    flops = int(Rp * 2 * sum(W.shape[0] * W.shape[1] for (W, _) in weights))
    trans = int(Rp * sum(W.shape[1] for (W, _) in weights[:-1]))
    bytes_acc = int(xp.size * 4 + Rp * Fout * 2 + w_bytes)

    out = pl.pallas_call(
        kernel,
        out_shape=jax.ShapeDtypeStruct((Rp, Fout), jnp.bfloat16),
        grid=(Rp // TM,),
        in_specs=[pl.BlockSpec((TM, Fin), lambda i: (i, 0))] + wspecs,
        out_specs=pl.BlockSpec((TM, Fout), lambda i: (i, 0)),
        compiler_params=pltpu.CompilerParams(
            dimension_semantics=("parallel",),
            vmem_limit_bytes=_VMEM_LIMIT),
        cost_estimate=pl.CostEstimate(flops=flops, transcendentals=trans,
                                      bytes_accessed=bytes_acc),
    )(xp, *wargs)
    return out if Rp == R else out[:R]


# ----------------------------------------------------------------------------
# One fused einnet stack iteration:
#   hm = h*mask; X = sin(hm)*mask; pooled_t = eq_t(X)/clamp(eq_t(mask),1e-12);
#   out = MLP(stack(pooled)) * mask + hm
# ----------------------------------------------------------------------------
def stack_forward(h, mask, plans, weights):
    B, N, H = h.shape
    specs = [_term_spec(p) for p in plans]
    T = len(specs)
    full_idx = [t for t, s in enumerate(specs) if s['cat'] == 'full']
    row_idx = [t for t, s in enumerate(specs) if s['cat'] == 'row']
    cs_idx = [t for t, s in enumerate(specs) if s['cat'] == 'cs']
    nfull, nrow, ncs = len(full_idx), len(row_idx), len(cs_idx)

    nlayers = len(weights)
    W1, b1 = weights[0]
    n1 = W1.shape[1]
    Fout = weights[-1][0].shape[1]
    assert W1.shape[0] == T * H, "first stack layer must map T*H -> nh"
    assert Fout == H, "residual add requires stack MLP output width == H"

    # Torch flattens stack(dim=-1) as feature index f = k*T + t (H-major);
    # reorganize the first layer term-major so each term owns a contiguous
    # (H, n1) weight block.
    W1_tmaj = jnp.transpose(W1.reshape(H, T, n1), (1, 0, 2))   # (T, H, n1)

    wargs, wspecs, w_bytes = [], [], 0
    if nfull:
        w1_full = jnp.concatenate([W1_tmaj[t] for t in full_idx],
                                  axis=0).astype(jnp.bfloat16)        # (nfull*H, n1)
        wargs.append(w1_full)
        wspecs.append(pl.BlockSpec((nfull * H, n1), lambda bb: (0, 0)))
        w_bytes += w1_full.size * 2
    if nrow:
        w1_row = jnp.stack([W1_tmaj[t] for t in row_idx], axis=0)     # (nrow, H, n1) fp32
        wargs.append(w1_row)
        wspecs.append(pl.BlockSpec((nrow, H, n1), lambda bb: (0, 0, 0)))
        w_bytes += w1_row.size * 4
    if ncs:
        # lane-constant terms only ever see sum_h W1[t,h,:]
        w1_cs = jnp.stack([jnp.sum(W1_tmaj[t], axis=0) for t in cs_idx], axis=0)  # (ncs, n1)
        wargs.append(w1_cs)
        wspecs.append(pl.BlockSpec((ncs, n1), lambda bb: (0, 0)))
        w_bytes += w1_cs.size * 4
    wargs.append(b1)
    wspecs.append(pl.BlockSpec(b1.shape, lambda bb: (0, 0)))
    w_bytes += b1.size * 4
    for (W, bv) in weights[1:]:
        wargs += [W.astype(jnp.bfloat16), bv]
        wspecs += [pl.BlockSpec(W.shape, lambda bb: (0, 0)),
                   pl.BlockSpec(bv.shape, lambda bb: (0, 0))]
        w_bytes += W.size * 2 + bv.size * 4

    def kernel(h_ref, m_ref, *rest):
        wrefs, o_ref = rest[:-1], rest[-1]
        pos = 0
        w1full_ref = w1row_ref = w1cs_ref = None
        if nfull:
            w1full_ref = wrefs[pos]; pos += 1
        if nrow:
            w1row_ref = wrefs[pos]; pos += 1
        if ncs:
            w1cs_ref = wrefs[pos]; pos += 1
        b1_ref = wrefs[pos]; pos += 1
        tail_refs = wrefs[pos:]

        m = m_ref[...]                                   # (N, 1) fp32
        hm = h_ref[...].astype(jnp.float32) * m          # skip = h * mask
        Y = jnp.sin(hm) * m                              # einpool input, masked

        Hf = float(H)
        cache = {}

        def tok(name):
            if name in cache:
                return cache[name]
            if name == 'Y':
                v = Y
            elif name == 'rowsum':
                v = jnp.sum(Y, axis=1, keepdims=True)                    # (N,1)
            elif name == 'colsum':
                v = jnp.sum(Y, axis=0, keepdims=True)                    # (1,H)
            elif name == 'total':
                v = jnp.sum(tok('colsum'), axis=1, keepdims=True)        # (1,1)
            elif name == 'qab':
                v = jnp.sum(tok(('qb', True, True)), axis=0, keepdims=True)
            elif name == 'S':
                v = jnp.sum(m, axis=0, keepdims=True)                    # (1,1)
            elif name == 'S2':
                v = jnp.sum(m * m, axis=0, keepdims=True)                # (1,1)
            elif isinstance(name, tuple) and name[0] == 'qa':
                _, o1, o2 = name
                f1 = Y if o1 else tok('rowsum')
                f2 = Y if o2 else tok('rowsum')
                v = jnp.sum(f1 * f2, axis=0, keepdims=True)              # (1,H)/(1,1)
            elif isinstance(name, tuple) and name[0] == 'qb':
                _, o1, o2 = name
                g1 = Y if o1 else tok('colsum')
                g2 = Y if o2 else tok('colsum')
                v = jnp.sum(g1 * g2, axis=1, keepdims=True)              # (N,1)/(1,1)
            else:
                raise ValueError(name)
            cache[name] = v
            return v

        inv_cache = {}

        def inv_den(key):
            # exact (non-approximate) reciprocal, memoized across terms
            if key in inv_cache:
                return inv_cache[key]
            val, const = None, 1.0
            for f in key:
                if f == 'H':
                    const *= Hf
                else:
                    v = m if f == 'm' else tok(f)
                    val = v if val is None else val * v
            if const != 1.0:
                val = val * const
            inv = 1.0 / jnp.maximum(val, 1e-12)
            inv_cache[key] = inv
            return inv

        def prod_tokens(tokens):
            out = None
            for name in tokens:
                v = tok(name)
                out = v if out is None else out * v
            return out

        def scales_for(s):
            c = prod_tokens(s['col'])
            sc = prod_tokens(s['scal'])
            inv = inv_den(s['den'])
            if s['den_is_col']:
                c = inv if c is None else c * inv
            else:
                sc = inv if sc is None else sc * inv
            return c, sc

        # ---- layer 1: rank-structured accumulation ------------------------
        acc = jnp.zeros((N, n1), jnp.float32)

        if nfull:
            # One wide-K MXU matmul over the concatenated full-rank operands.
            ops = []
            for t in full_idx:
                s = specs[t]
                op = prod_tokens(s['full'])
                r = prod_tokens(s['row'])
                c, sc = scales_for(s)
                if r is not None:
                    op = op * r
                if c is not None:
                    op = op * c
                if sc is not None:
                    op = op * sc
                ops.append(op.astype(jnp.bfloat16))
            wide = jnp.concatenate(ops, axis=1)          # (N, nfull*H) bf16
            acc = acc + jnp.dot(wide, w1full_ref[...],
                                preferred_element_type=jnp.float32)

        if nrow:
            # rank-1 terms: col_vec (N,1) x (row_vec (1,H) @ W1[t])
            w1row = w1row_ref[...]
            for j, t in enumerate(row_idx):
                s = specs[t]
                row = prod_tokens(s['row'])
                c, sc = scales_for(s)
                if sc is not None:
                    row = row * sc
                rw = jnp.dot(row, w1row[j], preferred_element_type=jnp.float32)  # (1,n1)
                acc = acc + (rw if c is None else c * rw)

        if ncs:
            # lane-constant terms: scaled precomputed column-sum of W1[t]
            w1cs = w1cs_ref[...]
            for j, t in enumerate(cs_idx):
                s = specs[t]
                c, sc = scales_for(s)
                scale = c if sc is None else (sc if c is None else c * sc)
                acc = acc + scale * w1cs[j:j + 1, :]

        # ---- remaining stack-MLP layers ------------------------------------
        hcur = acc + b1_ref[...]
        for li in range(1, nlayers):
            hcur = _gelu(hcur)
            W = tail_refs[2 * (li - 1)][...]
            bvec = tail_refs[2 * (li - 1) + 1][...]
            hcur = jnp.dot(hcur.astype(W.dtype), W,
                           preferred_element_type=jnp.float32) + bvec

        o_ref[...] = (hcur * m + hm).astype(o_ref.dtype)

    later = weights[1:]
    flops = int(B * (2 * N * (nfull * H) * n1
                     + 2 * H * n1 * nrow
                     + 2 * N * n1 * (nrow + ncs)
                     + sum(2 * N * W.shape[0] * W.shape[1] for (W, _) in later)
                     + 12 * N * H))
    trans = int(B * (N * H + N * sum(W.shape[1] for (W, _) in weights[:-1])))
    bytes_acc = int(2 * B * N * H * 2 + B * N * 4 + w_bytes)   # h in/out bf16 + mask + weights

    return pl.pallas_call(
        kernel,
        out_shape=jax.ShapeDtypeStruct((B, N, H), jnp.bfloat16),
        grid=(B,),
        in_specs=[pl.BlockSpec((None, N, H), lambda bb: (bb, 0, 0)),
                  pl.BlockSpec((None, N, 1), lambda bb: (bb, 0, 0))] + wspecs,
        out_specs=pl.BlockSpec((None, N, H), lambda bb: (bb, 0, 0)),
        compiler_params=pltpu.CompilerParams(
            dimension_semantics=("parallel",),   # B tiles split across v7x's 2 TCs
            vmem_limit_bytes=_VMEM_LIMIT),
        cost_estimate=pl.CostEstimate(flops=flops, transcendentals=trans,
                                      bytes_accessed=bytes_acc),
    )(h, mask, *wargs)


# ----------------------------------------------------------------------------
# Parameter init (deterministic; matches nn.Linear's U(-1/sqrt(fan_in), ..))
# Weights stored as (fan_in, fan_out) = torch_weight.T; bias as (1, fan_out).
# ----------------------------------------------------------------------------
def init_linear(key, fan_in, fan_out):
    kw, kb = jax.random.split(key)
    bound = 1.0 / math.sqrt(fan_in)
    W = jax.random.uniform(kw, (fan_in, fan_out), jnp.float32, -bound, bound)
    b = jax.random.uniform(kb, (1, fan_out), jnp.float32, -bound, bound)
    return W, b


def init_mlp(key, ninput, nh, noutput, nlayers):
    keys = jax.random.split(key, max(nlayers, 1))
    if nlayers == 1:
        return [init_linear(keys[0], ninput, noutput)]
    layers = [init_linear(keys[0], ninput, nh)]
    for i in range(nlayers - 2):
        layers.append(init_linear(keys[i + 1], nh, nh))
    layers.append(init_linear(keys[-1], nh, noutput))
    return layers


# ----------------------------------------------------------------------------
# einnet forward (Pallas)
# ----------------------------------------------------------------------------
def einnet_forward(X, params, plans, mask=None):
    B, N, Fin = X.shape
    h = mlp_forward(X.reshape(B * N, Fin), params['t0'])          # t0, bf16 out
    H = h.shape[-1]
    h = h.reshape(B, N, H)
    if mask is None:
        mask = jnp.ones((B, N, 1), jnp.float32)                   # mean*0 + 1
    for stack_weights in params['t']:
        h = stack_forward(h, mask, plans, stack_weights)          # fused stack (bf16 h)
    return h.astype(jnp.float32)


# ----------------------------------------------------------------------------
# Pure-JAX fp32 reference (generalized einsum on the eq strings, exact erf GELU)
# ----------------------------------------------------------------------------
def _general_einsum(eq, X):
    lhs, rhs = eq.split('->')
    ops = lhs.split(',')
    in_letters = set(''.join(ops))
    kept = [c for c in rhs if c in in_letters]
    core = jnp.einsum(lhs + '->' + ''.join(kept), *([X] * len(ops)))
    missing = tuple(i for i, c in enumerate(rhs) if c not in in_letters)
    if missing:
        core = jnp.expand_dims(core, axis=missing)
    return jnp.broadcast_to(core, X.shape)


def _einpool_ref(X, mask, eqs):
    maskE = jnp.broadcast_to(mask, X.shape)
    Xm = X * maskE
    h = jnp.stack([_general_einsum(eq, Xm) for eq in eqs], axis=-1)
    n = jnp.stack([_general_einsum(eq, maskE) for eq in eqs], axis=-1)
    return h / jnp.maximum(n, 1e-12)


def _mlp_ref(x, weights):
    h = x
    for i, (W, b) in enumerate(weights):
        h = h @ W + b
        if i < len(weights) - 1:
            h = jax.nn.gelu(h, approximate=False)
    return h


def einnet_reference(X, params, eqs, mask=None):
    B, N, Fin = X.shape
    h = _mlp_ref(X.reshape(B * N, Fin), params['t0']).reshape(B, N, -1)
    if mask is None:
        mask = jnp.ones((B, N, 1), jnp.float32)
    for weights in params['t']:
        h = h * mask
        skip = h
        pooled = _einpool_ref(jnp.sin(h), mask, eqs).reshape(B, N, -1)
        h = _mlp_ref(pooled, weights)
        h = h * mask
        h = h + skip
    return h


if __name__ == "__main__":
    # small shapes implied by the forward: X is (batch, set_size, nhinput)
    B, N = 2, 8
    nhinput, nh0, nh = 16, 32, 32
    nstacks, nlayers, order = 2, 2, 2   # order <= 2 so all terms stay in-kernel

    eqs = equivariance_terms(form='X_Bab', order=order, deps=[])
    plans = tuple(parse_eq(e) for e in eqs)
    T = len(plans)

    key = jax.random.PRNGKey(0)
    kx, k0, *ks = jax.random.split(key, 2 + nstacks)
    X = jax.random.normal(kx, (B, N, nhinput), jnp.float32)
    params = {
        't0': init_mlp(k0, nhinput, nh, nh0, nlayers),
        't': [init_mlp(ks[i], T * nh0, nh, nh0, nlayers) for i in range(nstacks)],
    }

    fwd = jax.jit(einnet_forward, static_argnums=(2,))
    out = jax.block_until_ready(fwd(X, params, plans))
    assert out.shape == (B, N, nh0)
    assert bool(jnp.all(jnp.isfinite(out)))

    # tolerance check vs. the exact fp32 reference (covers bf16 storage,
    # bf16 MXU operands and the tanh-GELU approximation)
    ref = einnet_reference(X, params, eqs)
    err = float(jnp.max(jnp.abs(out - ref)))
    assert err < 1e-1, f"max abs error vs reference: {err}"
    print("KERNEL_OK")
</pallas_src>

<mosaic_0001>
module attributes {stable_mosaic.version = 11 : i64} {
  func.func @kernel(%arg0: i32, %arg1: memref<16x16xf32, #tpu.memory_space<vmem>>, %arg2: memref<16x32xbf16, #tpu.memory_space<vmem>>, %arg3: memref<1x32xf32, #tpu.memory_space<vmem>>, %arg4: memref<32x32xbf16, #tpu.memory_space<vmem>>, %arg5: memref<1x32xf32, #tpu.memory_space<vmem>>, %arg6: memref<16x32xbf16, #tpu.memory_space<vmem>>) attributes {dimension_semantics = [#tpu.dimension_semantics<parallel>], iteration_bounds = array<i64: 1>, scalar_prefetch = 0 : i64, scratch_operands = 0 : i64, tpu.core_type = #tpu.core_type<tc>, window_params = [{transform_indices = @transform_0, window_bounds = array<i64: 16, 16>}, {pipeline_mode = #tpu.pipeline_mode<synchronous>, transform_indices = @transform_1, window_bounds = array<i64: 16, 32>}, {pipeline_mode = #tpu.pipeline_mode<synchronous>, transform_indices = @transform_2, window_bounds = array<i64: 1, 32>}, {pipeline_mode = #tpu.pipeline_mode<synchronous>, transform_indices = @transform_3, window_bounds = array<i64: 32, 32>}, {pipeline_mode = #tpu.pipeline_mode<synchronous>, transform_indices = @transform_4, window_bounds = array<i64: 1, 32>}, {transform_indices = @transform_5, window_bounds = array<i64: 16, 32>}]} {
    %c0 = arith.constant 0 : index
    %c0_0 = arith.constant 0 : index
    %0 = vector.load %arg1[%c0, %c0_0] : memref<16x16xf32, #tpu.memory_space<vmem>>, vector<16x16xf32>
    %c0_1 = arith.constant 0 : index
    %c0_2 = arith.constant 0 : index
    %1 = vector.load %arg2[%c0_1, %c0_2] : memref<16x32xbf16, #tpu.memory_space<vmem>>, vector<16x32xbf16>
    %c0_3 = arith.constant 0 : index
    %c0_4 = arith.constant 0 : index
    %2 = vector.load %arg3[%c0_3, %c0_4] : memref<1x32xf32, #tpu.memory_space<vmem>>, vector<1x32xf32>
    %3 = arith.truncf %0 : vector<16x16xf32> to vector<16x16xbf16>
    %cst = arith.constant dense<0.000000e+00> : vector<16x32xf32>
    %4 = tpu.matmul %3, %1, %cst {dimension_numbers = #tpu.dot_dimension_numbers<[1], [0], [0], [1], [0, 0, 1, 1], [], []>} : vector<16x16xbf16>, vector<16x32xbf16>, vector<16x32xf32> -> vector<16x32xf32>
    %5 = vector.broadcast %2 : vector<1x32xf32> to vector<16x32xf32>
    %6 = arith.addf %4, %5 : vector<16x32xf32>
    %cst_5 = arith.constant 5.000000e-01 : f32
    %7 = vector.broadcast %cst_5 : f32 to vector<16x32xf32>
    %8 = arith.mulf %7, %6 : vector<16x32xf32>
    %cst_6 = arith.constant 4.471500e-02 : f32
    %9 = vector.broadcast %cst_6 : f32 to vector<16x32xf32>
    %10 = arith.mulf %9, %6 : vector<16x32xf32>
    %11 = arith.mulf %10, %6 : vector<16x32xf32>
    %12 = arith.mulf %11, %6 : vector<16x32xf32>
    %13 = arith.addf %6, %12 : vector<16x32xf32>
    %cst_7 = arith.constant 0.797884583 : f32
    %14 = vector.broadcast %cst_7 : f32 to vector<16x32xf32>
    %15 = arith.mulf %14, %13 : vector<16x32xf32>
    %16 = math.tanh %15 : vector<16x32xf32>
    %cst_8 = arith.constant 1.000000e+00 : f32
    %17 = vector.broadcast %cst_8 : f32 to vector<16x32xf32>
    %18 = arith.addf %17, %16 : vector<16x32xf32>
    %19 = arith.mulf %8, %18 : vector<16x32xf32>
    %c0_9 = arith.constant 0 : index
    %c0_10 = arith.constant 0 : index
    %20 = vector.load %arg4[%c0_9, %c0_10] : memref<32x32xbf16, #tpu.memory_space<vmem>>, vector<32x32xbf16>
    %c0_11 = arith.constant 0 : index
    %c0_12 = arith.constant 0 : index
    %21 = vector.load %arg5[%c0_11, %c0_12] : memref<1x32xf32, #tpu.memory_space<vmem>>, vector<1x32xf32>
    %22 = arith.truncf %19 : vector<16x32xf32> to vector<16x32xbf16>
    %cst_13 = arith.constant dense<0.000000e+00> : vector<16x32xf32>
    %23 = tpu.matmul %22, %20, %cst_13 {dimension_numbers = #tpu.dot_dimension_numbers<[1], [0], [0], [1], [0, 0, 1, 1], [], []>} : vector<16x32xbf16>, vector<32x32xbf16>, vector<16x32xf32> -> vector<16x32xf32>
    %24 = vector.broadcast %21 : vector<1x32xf32> to vector<16x32xf32>
    %25 = arith.addf %23, %24 : vector<16x32xf32>
    %26 = arith.truncf %25 : vector<16x32xf32> to vector<16x32xbf16>
    %c0_14 = arith.constant 0 : index
    %c0_15 = arith.constant 0 : index
    %27 = vector.load %arg6[%c0_14, %c0_15] : memref<16x32xbf16, #tpu.memory_space<vmem>>, vector<16x32xbf16>
    tpu.vector_store %arg6[%c0_14, %c0_15], %26 {strides = array<i32>} : memref<16x32xbf16, #tpu.memory_space<vmem>>, vector<16x32xbf16>,
    return
  }
  func.func @transform_0(%arg0: i32) -> (i32, i32) {
    %c0_i32 = arith.constant 0 : i32
    %c0_i32_0 = arith.constant 0 : i32
    return %arg0, %c0_i32 : i32, i32
  }
  func.func @transform_1(%arg0: i32) -> (i32, i32) {
    %c0_i32 = arith.constant 0 : i32
    %c0_i32_0 = arith.constant 0 : i32
    %c0_i32_1 = arith.constant 0 : i32
    return %c0_i32, %c0_i32_0 : i32, i32
  }
  func.func @transform_2(%arg0: i32) -> (i32, i32) {
    %c0_i32 = arith.constant 0 : i32
    %c0_i32_0 = arith.constant 0 : i32
    %c0_i32_1 = arith.constant 0 : i32
    return %c0_i32, %c0_i32_0 : i32, i32
  }
  func.func @transform_3(%arg0: i32) -> (i32, i32) {
    %c0_i32 = arith.constant 0 : i32
    %c0_i32_0 = arith.constant 0 : i32
    %c0_i32_1 = arith.constant 0 : i32
    return %c0_i32, %c0_i32_0 : i32, i32
  }
  func.func @transform_4(%arg0: i32) -> (i32, i32) {
    %c0_i32 = arith.constant 0 : i32
    %c0_i32_0 = arith.constant 0 : i32
    %c0_i32_1 = arith.constant 0 : i32
    return %c0_i32, %c0_i32_0 : i32, i32
  }
  func.func @transform_5(%arg0: i32) -> (i32, i32) {
    %c0_i32 = arith.constant 0 : i32
    %c0_i32_0 = arith.constant 0 : i32
    return %arg0, %c0_i32 : i32, i32
  }
}

module attributes {stable_mosaic.version = 11 : i64} {
  func.func @kernel(%arg0: i32, %arg1: memref<1x8x32xbf16, #tpu.memory_space<vmem>>, %arg2: memref<1x8x1xf32, #tpu.memory_space<vmem>>, %arg3: memref<32x32xbf16, #tpu.memory_space<vmem>>, %arg4: memref<3x32x32xf32, #tpu.memory_space<vmem>>, %arg5: memref<7x32xf32, #tpu.memory_space<vmem>>, %arg6: memref<1x32xf32, #tpu.memory_space<vmem>>, %arg7: memref<32x32xbf16, #tpu.memory_space<vmem>>, %arg8: memref<1x32xf32, #tpu.memory_space<vmem>>, %arg9: memref<1x8x32xbf16, #tpu.memory_space<vmem>>) attributes {dimension_semantics = [#tpu.dimension_semantics<parallel>], iteration_bounds = array<i64: 2>, scalar_prefetch = 0 : i64, scratch_operands = 0 : i64, tpu.core_type = #tpu.core_type<tc>, window_params = [{transform_indices = @transform_0, window_bounds = array<i64: 1, 8, 32>}, {transform_indices = @transform_1, window_bounds = array<i64: 1, 8, 1>}, {pipeline_mode = #tpu.pipeline_mode<synchronous>, transform_indices = @transform_2, window_bounds = array<i64: 32, 32>}, {pipeline_mode = #tpu.pipeline_mode<synchronous>, transform_indices = @transform_3, window_bounds = array<i64: 3, 32, 32>}, {pipeline_mode = #tpu.pipeline_mode<synchronous>, transform_indices = @transform_4, window_bounds = array<i64: 7, 32>}, {pipeline_mode = #tpu.pipeline_mode<synchronous>, transform_indices = @transform_5, window_bounds = array<i64: 1, 32>}, {pipeline_mode = #tpu.pipeline_mode<synchronous>, transform_indices = @transform_6, window_bounds = array<i64: 32, 32>}, {pipeline_mode = #tpu.pipeline_mode<synchronous>, transform_indices = @transform_7, window_bounds = array<i64: 1, 32>}, {transform_indices = @transform_8, window_bounds = array<i64: 1, 8, 32>}]} {
    %c0 = arith.constant 0 : index
    %c0_0 = arith.constant 0 : index
    %c0_1 = arith.constant 0 : index
    %0 = vector.load %arg2[%c0, %c0_0, %c0_1] : memref<1x8x1xf32, #tpu.memory_space<vmem>>, vector<1x8x1xf32>
    %1 = vector.shape_cast %0 : vector<1x8x1xf32> to vector<8x1xf32>
    %c0_2 = arith.constant 0 : index
    %c0_3 = arith.constant 0 : index
    %c0_4 = arith.constant 0 : index
    %2 = vector.load %arg1[%c0_2, %c0_3, %c0_4] : memref<1x8x32xbf16, #tpu.memory_space<vmem>>, vector<1x8x32xbf16>
    %3 = vector.shape_cast %2 : vector<1x8x32xbf16> to vector<8x32xbf16>
    %4 = arith.extf %3 : vector<8x32xbf16> to vector<8x32xf32>
    %5 = vector.broadcast %1 : vector<8x1xf32> to vector<8x32xf32>
    %6 = arith.mulf %4, %5 : vector<8x32xf32>
    %7 = math.sin %6 : vector<8x32xf32>
    %8 = vector.broadcast %1 : vector<8x1xf32> to vector<8x32xf32>
    %9 = arith.mulf %7, %8 : vector<8x32xf32>
    %cst = arith.constant 0.000000e+00 : f32
    %10 = vector.broadcast %cst : f32 to vector<8x32xf32>
    %cst_5 = arith.constant 9.99999996E-13 : f32
    %11 = vector.broadcast %cst_5 : f32 to vector<8x1xf32>
    %12 = arith.maximumf %1, %11 : vector<8x1xf32>
    %cst_6 = arith.constant 1.000000e+00 : f32
    %13 = vector.broadcast %cst_6 : f32 to vector<8x1xf32>
    %14 = arith.divf %13, %12 : vector<8x1xf32>
    %15 = vector.broadcast %14 : vector<8x1xf32> to vector<8x32xf32>
    %16 = arith.mulf %9, %15 : vector<8x32xf32>
    %17 = arith.truncf %16 : vector<8x32xf32> to vector<8x32xbf16>
    %c0_7 = arith.constant 0 : index
    %c0_8 = arith.constant 0 : index
    %18 = vector.load %arg3[%c0_7, %c0_8] : memref<32x32xbf16, #tpu.memory_space<vmem>>, vector<32x32xbf16>
    %cst_9 = arith.constant dense<0.000000e+00> : vector<8x32xf32>
    %19 = tpu.matmul %17, %18, %cst_9 {dimension_numbers = #tpu.dot_dimension_numbers<[1], [0], [0], [1], [0, 0, 1, 1], [], []>} : vector<8x32xbf16>, vector<32x32xbf16>, vector<8x32xf32> -> vector<8x32xf32>
    %20 = arith.addf %10, %19 : vector<8x32xf32>
    %c0_10 = arith.constant 0 : index
    %c0_11 = arith.constant 0 : index
    %c0_12 = arith.constant 0 : index
    %21 = vector.load %arg4[%c0_10, %c0_11, %c0_12] : memref<3x32x32xf32, #tpu.memory_space<vmem>>, vector<3x32x32xf32>
    %cst_13 = arith.constant dense<0.000000e+00> : vector<32xf32>
    %22 = vector.multi_reduction <add>, %9, %cst_13 [0] : vector<8x32xf32> to vector<32xf32>
    %23 = vector.shape_cast %22 : vector<32xf32> to vector<1x32xf32>
    %cst_14 = arith.constant dense<0.000000e+00> : vector<1xf32>
    %24 = vector.multi_reduction <add>, %1, %cst_14 [0] : vector<8x1xf32> to vector<1xf32>
    %25 = vector.shape_cast %24 : vector<1xf32> to vector<1x1xf32>
    %cst_15 = arith.constant 9.99999996E-13 : f32
    %26 = vector.broadcast %cst_15 : f32 to vector<1x1xf32>
    %27 = arith.maximumf %25, %26 : vector<1x1xf32>
    %cst_16 = arith.constant 1.000000e+00 : f32
    %28 = vector.broadcast %cst_16 : f32 to vector<1x1xf32>
    %29 = arith.divf %28, %27 : vector<1x1xf32>
    %30 = vector.broadcast %29 : vector<1x1xf32> to vector<1x32xf32>
    %31 = arith.mulf %23, %30 : vector<1x32xf32>
    %32 = vector.extract_strided_slice %21 {offsets = [0, 0, 0], sizes = [1, 32, 32], strides = [1, 1, 1]} : vector<3x32x32xf32> to vector<1x32x32xf32>
    %33 = vector.shape_cast %32 : vector<1x32x32xf32> to vector<32x32xf32>
    %cst_17 = arith.constant dense<0.000000e+00> : vector<1x32xf32>
    %34 = tpu.matmul %31, %33, %cst_17 {dimension_numbers = #tpu.dot_dimension_numbers<[1], [0], [0], [1], [0, 0, 1, 1], [], []>} : vector<1x32xf32>, vector<32x32xf32>, vector<1x32xf32> -> vector<1x32xf32>
    %35 = vector.broadcast %34 : vector<1x32xf32> to vector<8x32xf32>
    %36 = arith.addf %20, %35 : vector<8x32xf32>
    %37 = arith.mulf %9, %9 : vector<8x32xf32>
    %cst_18 = arith.constant dense<0.000000e+00> : vector<32xf32>
    %38 = vector.multi_reduction <add>, %37, %cst_18 [0] : vector<8x32xf32> to vector<32xf32>
    %39 = vector.shape_cast %38 : vector<32xf32> to vector<1x32xf32>
    %40 = arith.mulf %1, %1 : vector<8x1xf32>
    %cst_19 = arith.constant dense<0.000000e+00> : vector<1xf32>
    %41 = vector.multi_reduction <add>, %40, %cst_19 [0] : vector<8x1xf32> to vector<1xf32>
    %42 = vector.shape_cast %41 : vector<1xf32> to vector<1x1xf32>
    %cst_20 = arith.constant 9.99999996E-13 : f32
    %43 = vector.broadcast %cst_20 : f32 to vector<1x1xf32>
    %44 = arith.maximumf %42, %43 : vector<1x1xf32>
    %cst_21 = arith.constant 1.000000e+00 : f32
    %45 = vector.broadcast %cst_21 : f32 to vector<1x1xf32>
    %46 = arith.divf %45, %44 : vector<1x1xf32>
    %47 = vector.broadcast %46 : vector<1x1xf32> to vector<1x32xf32>
    %48 = arith.mulf %39, %47 : vector<1x32xf32>
    %49 = vector.extract_strided_slice %21 {offsets = [1, 0, 0], sizes = [1, 32, 32], strides = [1, 1, 1]} : vector<3x32x32xf32> to vector<1x32x32xf32>
    %50 = vector.shape_cast %49 : vector<1x32x32xf32> to vector<32x32xf32>
    %cst_22 = arith.constant dense<0.000000e+00> : vector<1x32xf32>
    %51 = tpu.matmul %48, %50, %cst_22 {dimension_numbers = #tpu.dot_dimension_numbers<[1], [0], [0], [1], [0, 0, 1, 1], [], []>} : vector<1x32xf32>, vector<32x32xf32>, vector<1x32xf32> -> vector<1x32xf32>
    %52 = vector.broadcast %51 : vector<1x32xf32> to vector<8x32xf32>
    %53 = arith.addf %36, %52 : vector<8x32xf32>
    %cst_23 = arith.constant dense<0.000000e+00> : vector<8xf32>
    %54 = vector.multi_reduction <add>, %9, %cst_23 [1] : vector<8x32xf32> to vector<8xf32>
    %55 = vector.shape_cast %54 : vector<8xf32> to vector<8x1xf32>
    %56 = vector.broadcast %55 : vector<8x1xf32> to vector<8x32xf32>
    %57 = arith.mulf %9, %56 : vector<8x32xf32>
    %cst_24 = arith.constant dense<0.000000e+00> : vector<32xf32>
    %58 = vector.multi_reduction <add>, %57, %cst_24 [0] : vector<8x32xf32> to vector<32xf32>
    %59 = vector.shape_cast %58 : vector<32xf32> to vector<1x32xf32>
    %cst_25 = arith.constant 3.200000e+01 : f32
    %60 = vector.broadcast %cst_25 : f32 to vector<1x1xf32>
    %61 = arith.mulf %42, %60 : vector<1x1xf32>
    %cst_26 = arith.constant 9.99999996E-13 : f32
    %62 = vector.broadcast %cst_26 : f32 to vector<1x1xf32>
    %63 = arith.maximumf %61, %62 : vector<1x1xf32>
    %cst_27 = arith.constant 1.000000e+00 : f32
    %64 = vector.broadcast %cst_27 : f32 to vector<1x1xf32>
    %65 = arith.divf %64, %63 : vector<1x1xf32>
    %66 = vector.broadcast %65 : vector<1x1xf32> to vector<1x32xf32>
    %67 = arith.mulf %59, %66 : vector<1x32xf32>
    %68 = vector.extract_strided_slice %21 {offsets = [2, 0, 0], sizes = [1, 32, 32], strides = [1, 1, 1]} : vector<3x32x32xf32> to vector<1x32x32xf32>
    %69 = vector.shape_cast %68 : vector<1x32x32xf32> to vector<32x32xf32>
    %cst_28 = arith.constant dense<0.000000e+00> : vector<1x32xf32>
    %70 = tpu.matmul %67, %69, %cst_28 {dimension_numbers = #tpu.dot_dimension_numbers<[1], [0], [0], [1], [0, 0, 1, 1], [], []>} : vector<1x32xf32>, vector<32x32xf32>, vector<1x32xf32> -> vector<1x32xf32>
    %71 = vector.broadcast %70 : vector<1x32xf32> to vector<8x32xf32>
    %72 = arith.addf %53, %71 : vector<8x32xf32>
    %c0_29 = arith.constant 0 : index
    %c0_30 = arith.constant 0 : index
    %73 = vector.load %arg5[%c0_29, %c0_30] : memref<7x32xf32, #tpu.memory_space<vmem>>, vector<7x32xf32>
    %cst_31 = arith.constant 3.200000e+01 : f32
    %74 = vector.broadcast %cst_31 : f32 to vector<8x1xf32>
    %75 = arith.mulf %1, %74 : vector<8x1xf32>
    %cst_32 = arith.constant 9.99999996E-13 : f32
    %76 = vector.broadcast %cst_32 : f32 to vector<8x1xf32>
    %77 = arith.maximumf %75, %76 : vector<8x1xf32>
    %cst_33 = arith.constant 1.000000e+00 : f32
    %78 = vector.broadcast %cst_33 : f32 to vector<8x1xf32>
    %79 = arith.divf %78, %77 : vector<8x1xf32>
    %80 = arith.mulf %55, %79 : vector<8x1xf32>
    %81 = vector.extract_strided_slice %73 {offsets = [0, 0], sizes = [1, 32], strides = [1, 1]} : vector<7x32xf32> to vector<1x32xf32>
    %82 = vector.broadcast %80 : vector<8x1xf32> to vector<8x32xf32>
    %83 = vector.broadcast %81 : vector<1x32xf32> to vector<8x32xf32>
    %84 = arith.mulf %82, %83 : vector<8x32xf32>
    %85 = arith.addf %72, %84 : vector<8x32xf32>
    %cst_34 = arith.constant dense<0.000000e+00> : vector<1xf32>
    %86 = vector.multi_reduction <add>, %23, %cst_34 [1] : vector<1x32xf32> to vector<1xf32>
    %87 = vector.shape_cast %86 : vector<1xf32> to vector<1x1xf32>
    %cst_35 = arith.constant 3.200000e+01 : f32
    %88 = vector.broadcast %cst_35 : f32 to vector<1x1xf32>
    %89 = arith.mulf %25, %88 : vector<1x1xf32>
    %cst_36 = arith.constant 9.99999996E-13 : f32
    %90 = vector.broadcast %cst_36 : f32 to vector<1x1xf32>
    %91 = arith.maximumf %89, %90 : vector<1x1xf32>
    %cst_37 = arith.constant 1.000000e+00 : f32
    %92 = vector.broadcast %cst_37 : f32 to vector<1x1xf32>
    %93 = arith.divf %92, %91 : vector<1x1xf32>
    %94 = arith.mulf %87, %93 : vector<1x1xf32>
    %95 = vector.extract_strided_slice %73 {offsets = [1, 0], sizes = [1, 32], strides = [1, 1]} : vector<7x32xf32> to vector<1x32xf32>
    %96 = vector.broadcast %94 : vector<1x1xf32> to vector<1x32xf32>
    %97 = arith.mulf %96, %95 : vector<1x32xf32>
    %98 = vector.broadcast %97 : vector<1x32xf32> to vector<8x32xf32>
    %99 = arith.addf %85, %98 : vector<8x32xf32>
    %100 = arith.mulf %9, %9 : vector<8x32xf32>
    %cst_38 = arith.constant dense<0.000000e+00> : vector<8xf32>
    %101 = vector.multi_reduction <add>, %100, %cst_38 [1] : vector<8x32xf32> to vector<8xf32>
    %102 = vector.shape_cast %101 : vector<8xf32> to vector<8x1xf32>
    %103 = arith.mulf %1, %1 : vector<8x1xf32>
    %cst_39 = arith.constant 3.200000e+01 : f32
    %104 = vector.broadcast %cst_39 : f32 to vector<8x1xf32>
    %105 = arith.mulf %103, %104 : vector<8x1xf32>
    %cst_40 = arith.constant 9.99999996E-13 : f32
    %106 = vector.broadcast %cst_40 : f32 to vector<8x1xf32>
    %107 = arith.maximumf %105, %106 : vector<8x1xf32>
    %cst_41 = arith.constant 1.000000e+00 : f32
    %108 = vector.broadcast %cst_41 : f32 to vector<8x1xf32>
    %109 = arith.divf %108, %107 : vector<8x1xf32>
    %110 = arith.mulf %102, %109 : vector<8x1xf32>
    %111 = vector.extract_strided_slice %73 {offsets = [2, 0], sizes = [1, 32], strides = [1, 1]} : vector<7x32xf32> to vector<1x32xf32>
    %112 = vector.broadcast %110 : vector<8x1xf32> to vector<8x32xf32>
    %113 = vector.broadcast %111 : vector<1x32xf32> to vector<8x32xf32>
    %114 = arith.mulf %112, %113 : vector<8x32xf32>
    %115 = arith.addf %99, %114 : vector<8x32xf32>
    %cst_42 = arith.constant dense<0.000000e+00> : vector<1xf32>
    %116 = vector.multi_reduction <add>, %102, %cst_42 [0] : vector<8x1xf32> to vector<1xf32>
    %117 = vector.shape_cast %116 : vector<1xf32> to vector<1x1xf32>
    %118 = arith.mulf %117, %65 : vector<1x1xf32>
    %119 = vector.extract_strided_slice %73 {offsets = [3, 0], sizes = [1, 32], strides = [1, 1]} : vector<7x32xf32> to vector<1x32xf32>
    %120 = vector.broadcast %118 : vector<1x1xf32> to vector<1x32xf32>
    %121 = arith.mulf %120, %119 : vector<1x32xf32>
    %122 = vector.broadcast %121 : vector<1x32xf32> to vector<8x32xf32>
    %123 = arith.addf %115, %122 : vector<8x32xf32>
    %124 = arith.mulf %55, %55 : vector<8x1xf32>
    %cst_43 = arith.constant dense<0.000000e+00> : vector<1xf32>
    %125 = vector.multi_reduction <add>, %124, %cst_43 [0] : vector<8x1xf32> to vector<1xf32>
    %126 = vector.shape_cast %125 : vector<1xf32> to vector<1x1xf32>
    %cst_44 = arith.constant 1.024000e+03 : f32
    %127 = vector.broadcast %cst_44 : f32 to vector<1x1xf32>
    %128 = arith.mulf %42, %127 : vector<1x1xf32>
    %cst_45 = arith.constant 9.99999996E-13 : f32
    %129 = vector.broadcast %cst_45 : f32 to vector<1x1xf32>
    %130 = arith.maximumf %128, %129 : vector<1x1xf32>
    %cst_46 = arith.constant 1.000000e+00 : f32
    %131 = vector.broadcast %cst_46 : f32 to vector<1x1xf32>
    %132 = arith.divf %131, %130 : vector<1x1xf32>
    %133 = arith.mulf %126, %132 : vector<1x1xf32>
    %134 = vector.extract_strided_slice %73 {offsets = [4, 0], sizes = [1, 32], strides = [1, 1]} : vector<7x32xf32> to vector<1x32xf32>
    %135 = vector.broadcast %133 : vector<1x1xf32> to vector<1x32xf32>
    %136 = arith.mulf %135, %134 : vector<1x32xf32>
    %137 = vector.broadcast %136 : vector<1x32xf32> to vector<8x32xf32>
    %138 = arith.addf %123, %137 : vector<8x32xf32>
    %139 = vector.broadcast %23 : vector<1x32xf32> to vector<8x32xf32>
    %140 = arith.mulf %9, %139 : vector<8x32xf32>
    %cst_47 = arith.constant dense<0.000000e+00> : vector<8xf32>
    %141 = vector.multi_reduction <add>, %140, %cst_47 [1] : vector<8x32xf32> to vector<8xf32>
    %142 = vector.shape_cast %141 : vector<8xf32> to vector<8x1xf32>
    %143 = vector.broadcast %25 : vector<1x1xf32> to vector<8x1xf32>
    %144 = arith.mulf %143, %1 : vector<8x1xf32>
    %cst_48 = arith.constant 3.200000e+01 : f32
    %145 = vector.broadcast %cst_48 : f32 to vector<8x1xf32>
    %146 = arith.mulf %144, %145 : vector<8x1xf32>
    %cst_49 = arith.constant 9.99999996E-13 : f32
    %147 = vector.broadcast %cst_49 : f32 to vector<8x1xf32>
    %148 = arith.maximumf %146, %147 : vector<8x1xf32>
    %cst_50 = arith.constant 1.000000e+00 : f32
    %149 = vector.broadcast %cst_50 : f32 to vector<8x1xf32>
    %150 = arith.divf %149, %148 : vector<8x1xf32>
    %151 = arith.mulf %142, %150 : vector<8x1xf32>
    %152 = vector.extract_strided_slice %73 {offsets = [5, 0], sizes = [1, 32], strides = [1, 1]} : vector<7x32xf32> to vector<1x32xf32>
    %153 = vector.broadcast %151 : vector<8x1xf32> to vector<8x32xf32>
    %154 = vector.broadcast %152 : vector<1x32xf32> to vector<8x32xf32>
    %155 = arith.mulf %153, %154 : vector<8x32xf32>
    %156 = arith.addf %138, %155 : vector<8x32xf32>
    %157 = arith.mulf %23, %23 : vector<1x32xf32>
    %cst_51 = arith.constant dense<0.000000e+00> : vector<1xf32>
    %158 = vector.multi_reduction <add>, %157, %cst_51 [1] : vector<1x32xf32> to vector<1xf32>
    %159 = vector.shape_cast %158 : vector<1xf32> to vector<1x1xf32>
    %160 = arith.mulf %25, %25 : vector<1x1xf32>
    %cst_52 = arith.constant 3.200000e+01 : f32
    %161 = vector.broadcast %cst_52 : f32 to vector<1x1xf32>
    %162 = arith.mulf %160, %161 : vector<1x1xf32>
    %cst_53 = arith.constant 9.99999996E-13 : f32
    %163 = vector.broadcast %cst_53 : f32 to vector<1x1xf32>
    %164 = arith.maximumf %162, %163 : vector<1x1xf32>
    %cst_54 = arith.constant 1.000000e+00 : f32
    %165 = vector.broadcast %cst_54 : f32 to vector<1x1xf32>
    %166 = arith.divf %165, %164 : vector<1x1xf32>
    %167 = arith.mulf %159, %166 : vector<1x1xf32>
    %168 = vector.extract_strided_slice %73 {offsets = [6, 0], sizes = [1, 32], strides = [1, 1]} : vector<7x32xf32> to vector<1x32xf32>
    %169 = vector.broadcast %167 : vector<1x1xf32> to vector<1x32xf32>
    %170 = arith.mulf %169, %168 : vector<1x32xf32>
    %171 = vector.broadcast %170 : vector<1x32xf32> to vector<8x32xf32>
    %172 = arith.addf %156, %171 : vector<8x32xf32>
    %c0_55 = arith.constant 0 : index
    %c0_56 = arith.constant 0 : index
    %173 = vector.load %arg6[%c0_55, %c0_56] : memref<1x32xf32, #tpu.memory_space<vmem>>, vector<1x32xf32>
    %174 = vector.broadcast %173 : vector<1x32xf32> to vector<8x32xf32>
    %175 = arith.addf %172, %174 : vector<8x32xf32>
    %cst_57 = arith.constant 5.000000e-01 : f32
    %176 = vector.broadcast %cst_57 : f32 to vector<8x32xf32>
    %177 = arith.mulf %176, %175 : vector<8x32xf32>
    %cst_58 = arith.constant 4.471500e-02 : f32
    %178 = vector.broadcast %cst_58 : f32 to vector<8x32xf32>
    %179 = arith.mulf %178, %175 : vector<8x32xf32>
    %180 = arith.mulf %179, %175 : vector<8x32xf32>
    %181 = arith.mulf %180, %175 : vector<8x32xf32>
    %182 = arith.addf %175, %181 : vector<8x32xf32>
    %cst_59 = arith.constant 0.797884583 : f32
    %183 = vector.broadcast %cst_59 : f32 to vector<8x32xf32>
    %184 = arith.mulf %183, %182 : vector<8x32xf32>
    %185 = math.tanh %184 : vector<8x32xf32>
    %cst_60 = arith.constant 1.000000e+00 : f32
    %186 = vector.broadcast %cst_60 : f32 to vector<8x32xf32>
    %187 = arith.addf %186, %185 : vector<8x32xf32>
    %188 = arith.mulf %177, %187 : vector<8x32xf32>
    %c0_61 = arith.constant 0 : index
    %c0_62 = arith.constant 0 : index
    %189 = vector.load %arg7[%c0_61, %c0_62] : memref<32x32xbf16, #tpu.memory_space<vmem>>, vector<32x32xbf16>
    %c0_63 = arith.constant 0 : index
    %c0_64 = arith.constant 0 : index
    %190 = vector.load %arg8[%c0_63, %c0_64] : memref<1x32xf32, #tpu.memory_space<vmem>>, vector<1x32xf32>
    %191 = arith.truncf %188 : vector<8x32xf32> to vector<8x32xbf16>
    %cst_65 = arith.constant dense<0.000000e+00> : vector<8x32xf32>
    %192 = tpu.matmul %191, %189, %cst_65 {dimension_numbers = #tpu.dot_dimension_numbers<[1], [0], [0], [1], [0, 0, 1, 1], [], []>} : vector<8x32xbf16>, vector<32x32xbf16>, vector<8x32xf32> -> vector<8x32xf32>
    %193 = vector.broadcast %190 : vector<1x32xf32> to vector<8x32xf32>
    %194 = arith.addf %192, %193 : vector<8x32xf32>
    %195 = vector.broadcast %1 : vector<8x1xf32> to vector<8x32xf32>
    %196 = arith.mulf %194, %195 : vector<8x32xf32>
    %197 = arith.addf %196, %6 : vector<8x32xf32>
    %198 = arith.truncf %197 : vector<8x32xf32> to vector<8x32xbf16>
    %c0_66 = arith.constant 0 : index
    %c0_67 = arith.constant 0 : index
    %c0_68 = arith.constant 0 : index
    %199 = vector.load %arg9[%c0_66, %c0_67, %c0_68] : memref<1x8x32xbf16, #tpu.memory_space<vmem>>, vector<1x8x32xbf16>
    %200 = vector.shape_cast %199 : vector<1x8x32xbf16> to vector<8x32xbf16>
    %201 = vector.shape_cast %198 : vector<8x32xbf16> to vector<1x8x32xbf16>
    tpu.vector_store %arg9[%c0_66, %c0_67, %c0_68], %201 {strides = array<i32>} : memref<1x8x32xbf16, #tpu.memory_space<vmem>>, vector<1x8x32xbf16>,
    return
  }
  func.func @transform_0(%arg0: i32) -> (i32, i32, i32) {
    %c0_i32 = arith.constant 0 : i32
    %c0_i32_0 = arith.constant 0 : i32
    %c0_i32_1 = arith.constant 0 : i32
    return %arg0, %c0_i32, %c0_i32_0 : i32, i32, i32
  }
  func.func @transform_1(%arg0: i32) -> (i32, i32, i32) {
    %c0_i32 = arith.constant 0 : i32
    %c0_i32_0 = arith.constant 0 : i32
    %c0_i32_1 = arith.constant 0 : i32
    return %arg0, %c0_i32, %c0_i32_0 : i32, i32, i32
  }
  func.func @transform_2(%arg0: i32) -> (i32, i32) {
    %c0_i32 = arith.constant 0 : i32
    %c0_i32_0 = arith.constant 0 : i32
    %c0_i32_1 = arith.constant 0 : i32
    return %c0_i32, %c0_i32_0 : i32, i32
  }
  func.func @transform_3(%arg0: i32) -> (i32, i32, i32) {
    %c0_i32 = arith.constant 0 : i32
    %c0_i32_0 = arith.constant 0 : i32
    %c0_i32_1 = arith.constant 0 : i32
    %c0_i32_2 = arith.constant 0 : i32
    return %c0_i32, %c0_i32_0, %c0_i32_1 : i32, i32, i32
  }
  func.func @transform_4(%arg0: i32) -> (i32, i32) {
    %c0_i32 = arith.constant 0 : i32
    %c0_i32_0 = arith.constant 0 : i32
    %c0_i32_1 = arith.constant 0 : i32
    return %c0_i32, %c0_i32_0 : i32, i32
  }
  func.func @transform_5(%arg0: i32) -> (i32, i32) {
    %c0_i32 = arith.constant 0 : i32
    %c0_i32_0 = arith.constant 0 : i32
    %c0_i32_1 = arith.constant 0 : i32
    return %c0_i32, %c0_i32_0 : i32, i32
  }
  func.func @transform_6(%arg0: i32) -> (i32, i32) {
    %c0_i32 = arith.constant 0 : i32
    %c0_i32_0 = arith.constant 0 : i32
    %c0_i32_1 = arith.constant 0 : i32
    return %c0_i32, %c0_i32_0 : i32, i32
  }
  func.func @transform_7(%arg0: i32) -> (i32, i32) {
    %c0_i32 = arith.constant 0 : i32
    %c0_i32_0 = arith.constant 0 : i32
    %c0_i32_1 = arith.constant 0 : i32
    return %c0_i32, %c0_i32_0 : i32, i32
  }
  func.func @transform_8(%arg0: i32) -> (i32, i32, i32) {
    %c0_i32 = arith.constant 0 : i32
    %c0_i32_0 = arith.constant 0 : i32
    %c0_i32_1 = arith.constant 0 : i32
    return %arg0, %c0_i32, %c0_i32_0 : i32, i32, i32
  }
}

</mosaic_0001>

<llo_original>
// kernel: einnet_forward.3
$region0: #{einnet_forward.3}
  #allocation0 [shape = 'u32[]', space=smem, size = 0x4, offset = 0x4, fixed_abs, tag = 'smem constant byte address 0x4 - core index']
  #allocation1 [shape = 'u32[144,128]{1,0:T(1,128)}', space=vmem, size = 0x12000, scoped, tag = 'internal scratch']
  %s0 = inlined_call_operand.vmem [shape: f32[16,16], index: 0, kind: input, shape index: {}]
  %s1 = inlined_call_operand.vmem [shape: bf16[16,32], index: 1, kind: input, shape index: {}]
  %s2 = inlined_call_operand.vmem [shape: f32[1,32], index: 2, kind: input, shape index: {}]
  %s3 = inlined_call_operand.vmem [shape: bf16[32,32], index: 3, kind: input, shape index: {}]
  %s4 = inlined_call_operand.vmem [shape: f32[1,32], index: 4, kind: input, shape index: {}]
  %s5 = inlined_call_operand.vmem [shape: bf16[16,32], index: 5, kind: output, shape index: {}]
  %s6 = sld [smem:[#allocation0]]
  $region30: #{einnet_forward.3} parent=0
    _
  %s8 = ssub.s32 1, %s6
  %s9 = scalar_select 0, %s8, %s6
  // Predicated region
  $region2: #{einnet_forward.3} parent=0 // pred_check
    _
  $region3: #{einnet_forward.3} parent=0 // pred_check_branch
    %11 = sbr.rel (0) target = $region5
  $region4: #{einnet_forward.3} parent=0 // pred_region
    _
  $region5: #{einnet_forward.3} parent=0 // pred_fallthru
    _
  // Predicated region
  $region6: #{einnet_forward.3} parent=0 // pred_check
    _
  $region7: #{einnet_forward.3} parent=0 // pred_check_branch
    %13 = sbr.rel (0) target = $region9
  $region8: #{einnet_forward.3} parent=0 // pred_region
    _
  $region9: #{einnet_forward.3} parent=0 // pred_fallthru
    _
  // Predicated region
  $region10: #{einnet_forward.3} parent=0 // pred_check
    _
  $region11: #{einnet_forward.3} parent=0 // pred_check_branch
    %15 = sbr.rel (0) target = $region13
  $region12: #{einnet_forward.3} parent=0 // pred_region
    _
  $region13: #{einnet_forward.3} parent=0 // pred_fallthru
    _
  // Predicated region
  $region14: #{einnet_forward.3} parent=0 // pred_check
    _
  $region15: #{einnet_forward.3} parent=0 // pred_check_branch
    %17 = sbr.rel (0) target = $region17
  $region16: #{einnet_forward.3} parent=0 // pred_region
    _
  $region17: #{einnet_forward.3} parent=0 // pred_fallthru
    _
  // Predicated region
  $region18: #{einnet_forward.3} parent=0 // pred_check
    _
  $region19: #{einnet_forward.3} parent=0 // pred_check_branch
    %19 = sbr.rel (0) target = $region21
  $region20: #{einnet_forward.3} parent=0 // pred_region
    _
  $region21: #{einnet_forward.3} parent=0 // pred_fallthru
    _
  %v21 = vld [vmem:[%s0] sm:$0xff]
  %v22 = vld [vmem:[%s0 + $0x8] sm:$0xff]
  %v23 = vld [vmem:[%s1] sm:$0xf]
  %v24 = vld [vmem:[%s1 + $0x4] sm:$0xf]
  %v25 = vld [vmem:[%s2] sm:$0x1]
  %v26 = vpack.c.bf16 %v22, %v21
  %v28 = vlaneseq
  %v29 = vshrl.u32 %v28, 7
  %v30 = vsub.s32 0, %v29
  %v31 = vrot.slane %v25, %v30
  %v35 = vunpack.c.l.b16 %v23
  %v36 = vunpack.c.l.b16 %v24
  %v37 = vpack.c.b16 %v36, %v35
  %vm39 = vcmask 130048
  %v41 = vsel %vm39, %v26, 0
  %43 = vmatprep.subr.bf16.mxu0 0
  %44 = vmatpush1.bf16.msra.mxu0 %v37
  %45 = vmatprep.subr.bf16.mxu0 0
  %46 = vmatpush1.bf16.msra.mxu0 0
  %47 = vmatprep.subr.bf16.mxu0 0
  %48 = vmatpush1.bf16.msra.mxu0 0
  %49 = vmatprep.subr.bf16.mxu0 0
  %50 = vmatpush1.bf16.msra.mxu0 0
  %51 = vmatprep.subr.bf16.mxu0 0
  %52 = vmatpush1.bf16.msra.mxu0 0
  %53 = vmatprep.subr.bf16.mxu0 0
  %54 = vmatpush1.bf16.msra.mxu0 0
  %55 = vmatprep.subr.bf16.mxu0 0
  %56 = vmatpush1.bf16.msra.mxu0 0
  %57 = vmatprep.subr.bf16.mxu0 0
  %58 = vmatpush1.bf16.msra.mxu0 0
  %59 = vmatprep.subr.bf16.mxu0 0
  %60 = vmatpush1.bf16.msra.mxu0 0
  %61 = vmatprep.subr.bf16.mxu0 0
  %62 = vmatpush1.bf16.msra.mxu0 0
  %63 = vmatprep.subr.bf16.mxu0 0
  %64 = vmatpush1.bf16.msra.mxu0 0
  %65 = vmatprep.subr.bf16.mxu0 0
  %66 = vmatpush1.bf16.msra.mxu0 0
  %67 = vmatprep.subr.bf16.mxu0 0
  %68 = vmatpush1.bf16.msra.mxu0 0
  %69 = vmatprep.subr.bf16.mxu0 0
  %70 = vmatpush1.bf16.msra.mxu0 0
  %71 = vmatprep.subr.bf16.mxu0 0
  %72 = vmatpush1.bf16.msra.mxu0 0
  %73 = vmatprep.subr.bf16.mxu0 0
  %74 = vmatpush1.bf16.msra.mxu0 0
  %75 = vmatprep.mubr.bf16.mxu0 0
  %76 = vmatmul.mubr.bf16.gmra.mrb[0].mxu0 %v41
  %v77 = vpop.f32.mrb[0].mxu0
  %v78 = vadd.f32 %v31, %v77
  %v79 = vpop.f32.mrb[0].mxu0
  %v80 = vpop.f32.mrb[0].mxu0
  %v81 = vadd.f32 %v31, %v80
  %v82 = vpop.f32.mrb[0].mxu0
  %83 = vdwg.mxu0
  %v84 = vmul.f32 %v78, 0.5
  %v85 = vmul.f32 %v81, 0.5
  %v86 = vmul.f32 %v78, 0.044715
  %v87 = vmul.f32 %v81, 0.044715
  %v88 = vmul.f32 %v86, %v78
  %v89 = vmul.f32 %v87, %v81
  %v90 = vmul.f32 %v88, %v78
  %v91 = vmul.f32 %v89, %v81
  %v92 = vadd.f32 %v78, %v90
  %v93 = vadd.f32 %v81, %v91
  %v94 = vmul.f32 %v92, 0.7978846
  %v95 = vmul.f32 %v93, 0.7978846
  %v96 = vtanh.pop %v94
  %v97 = vtanh.pop %v95
  %v98 = vadd.f32 %v96, 1.0
  %v99 = vadd.f32 %v97, 1.0
  %v100 = vmul.f32 %v84, %v98
  %v101 = vmul.f32 %v85, %v99
  %v102 = vld [vmem:[%s3] sm:$0xf]
  %v103 = vld [vmem:[%s3 + $0x4] sm:$0xf]
  %v104 = vld [vmem:[%s3 + $0x8] sm:$0xf]
  %v105 = vld [vmem:[%s3 + $0xc] sm:$0xf]
  %v106 = vld [vmem:[%s4] sm:$0x1]
  %v107 = vpack.c.bf16 %v101, %v100
  %v109 = vlaneseq
  %v110 = vshrl.u32 %v109, 7
  %v111 = vsub.s32 0, %v110
  %v112 = vrot.slane %v106, %v111
  %v118 = vunpack.c.l.b16 %v102
  %v119 = vunpack.c.l.b16 %v103
  %v120 = vunpack.c.l.b16 %v104
  %v121 = vunpack.c.l.b16 %v105
  %v122 = vpack.c.b16 %v119, %v118
  %v123 = vpack.c.b16 %v121, %v120
  %vm126 = vcmask 261120
  %v128 = vsel %vm126, %v107, 0
  %130 = vmatprep.subr.bf16.mxu0 0
  %131 = vmatpush1.bf16.msra.mxu0 %v122
  %132 = vmatprep.subr.bf16.mxu0 0
  %133 = vmatpush1.bf16.msra.mxu0 %v123
  %134 = vmatprep.subr.bf16.mxu0 0
  %135 = vmatpush1.bf16.msra.mxu0 0
  %136 = vmatprep.subr.bf16.mxu0 0
  %137 = vmatpush1.bf16.msra.mxu0 0
  %138 = vmatprep.subr.bf16.mxu0 0
  %139 = vmatpush1.bf16.msra.mxu0 0
  %140 = vmatprep.subr.bf16.mxu0 0
  %141 = vmatpush1.bf16.msra.mxu0 0
  %142 = vmatprep.subr.bf16.mxu0 0
  %143 = vmatpush1.bf16.msra.mxu0 0
  %144 = vmatprep.subr.bf16.mxu0 0
  %145 = vmatpush1.bf16.msra.mxu0 0
  %146 = vmatprep.subr.bf16.mxu0 0
  %147 = vmatpush1.bf16.msra.mxu0 0
  %148 = vmatprep.subr.bf16.mxu0 0
  %149 = vmatpush1.bf16.msra.mxu0 0
  %150 = vmatprep.subr.bf16.mxu0 0
  %151 = vmatpush1.bf16.msra.mxu0 0
  %152 = vmatprep.subr.bf16.mxu0 0
  %153 = vmatpush1.bf16.msra.mxu0 0
  %154 = vmatprep.subr.bf16.mxu0 0
  %155 = vmatpush1.bf16.msra.mxu0 0
  %156 = vmatprep.subr.bf16.mxu0 0
  %157 = vmatpush1.bf16.msra.mxu0 0
  %158 = vmatprep.subr.bf16.mxu0 0
  %159 = vmatpush1.bf16.msra.mxu0 0
  %160 = vmatprep.subr.bf16.mxu0 0
  %161 = vmatpush1.bf16.msra.mxu0 0
  %162 = vmatprep.mubr.bf16.mxu0 0
  %163 = vmatmul.mubr.bf16.gmra.mrb[0].mxu0 %v128
  %v164 = vpop.f32.mrb[0].mxu0
  %v165 = vadd.f32 %v112, %v164
  %v166 = vpop.f32.mrb[0].mxu0
  %v167 = vpop.f32.mrb[0].mxu0
  %v168 = vadd.f32 %v112, %v167
  %v169 = vpop.f32.mrb[0].mxu0
  %170 = vdwg.mxu0
  %v171 = vpack.c.bf16 %v168, %v165
  %v173 = vunpack.c.l.b16 %v171
  %v174 = vunpack.c.h.b16 %v171
  %v175 = vpack.c.b16 %v173, %v173
  %v176 = vpack.c.b16 %v174, %v174
  %vm179 = vcmask 257024
  %180 = vst.msk [vmem:[%s5] sm:$0xf] %vm179, %v175
  %181 = vst.msk [vmem:[%s5 + $0x4] sm:$0xf] %vm179, %v176
  // Predicated region
  $region22: #{einnet_forward.3} parent=0 // pred_check
    _
  $region23: #{einnet_forward.3} parent=0 // pred_check_branch
    %183 = sbr.rel (0) target = $region25
  $region24: #{einnet_forward.3} parent=0 // pred_region
    _
  $region25: #{einnet_forward.3} parent=0 // pred_fallthru
    _
  // Predicated region
  $region26: #{einnet_forward.3} parent=0 // pred_check
    _
  $region27: #{einnet_forward.3} parent=0 // pred_check_branch
    %185 = sbr.rel (0) target = $region29
  $region28: #{einnet_forward.3} parent=0 // pred_region
    _
  $region29: #{einnet_forward.3} parent=0 // pred_fallthru
    _

// kernel: einnet_forward.4
$region0: #{einnet_forward.4}
  #allocation0 [shape = 'u32[]', space=smem, size = 0x4, offset = 0x4, fixed_abs, tag = 'smem constant byte address 0x4 - core index']
  #allocation1 [shape = 'u32[144,128]{1,0:T(1,128)}', space=vmem, size = 0x12000, scoped, tag = 'internal scratch']
  %s0 = inlined_call_operand.vmem [shape: bf16[2,8,32], index: 0, kind: input, shape index: {}]
  %s1 = inlined_call_operand.vmem [shape: f32[2,8,1], index: 1, kind: input, shape index: {}]
  %s2 = inlined_call_operand.vmem [shape: bf16[32,32], index: 2, kind: input, shape index: {}]
  %s3 = inlined_call_operand.vmem [shape: f32[3,32,32], index: 3, kind: input, shape index: {}]
  %s4 = inlined_call_operand.vmem [shape: f32[7,32], index: 4, kind: input, shape index: {}]
  %s5 = inlined_call_operand.vmem [shape: f32[1,32], index: 5, kind: input, shape index: {}]
  %s6 = inlined_call_operand.vmem [shape: bf16[32,32], index: 6, kind: input, shape index: {}]
  %s7 = inlined_call_operand.vmem [shape: f32[1,32], index: 7, kind: input, shape index: {}]
  %s8 = inlined_call_operand.vmem [shape: bf16[2,8,32], index: 8, kind: output, shape index: {}]
  %s9 = sld [smem:[#allocation0]]
  $region65: #{einnet_forward.4} parent=0
    _
  %s11 = ssub.s32 1, %s9
  %s12 = scalar_select 0, %s11, %s9
  loop: start=0, step=1, limit=4
  $region2: #{einnet_forward.4} parent=0 // loop_pre_header
    _
  $region3: #{einnet_forward.4} parent=0 // loop_header
    %s14 = sphi 0, %s18
    %p15 = scmp.ge.s32.totalorder %s14, 4
    %s24 = sphi 0, %s26
    %s27 = sphi 0, %s24
    %s28 = sphi 0, %s27
    %s44 = sphi 0, %s28
    %s50 = sphi 0, %s52
    %s53 = sphi 0, %s50
    %s54 = sphi 0, %s53
    %s70 = sphi 0, %s54
    %s74 = sphi 0, %s74
    %s76 = sphi 0, %s74
    %s77 = sphi 0, %s76
    %s91 = sphi 0, %s77
    %s95 = sphi 0, %s95
    %s97 = sphi 0, %s95
    %s98 = sphi 0, %s97
    %s112 = sphi 0, %s98
    %s116 = sphi 0, %s116
    %s118 = sphi 0, %s116
    %s119 = sphi 0, %s118
    %s133 = sphi 0, %s119
    %s137 = sphi 0, %s137
    %s139 = sphi 0, %s137
    %s140 = sphi 0, %s139
    %s154 = sphi 0, %s140
    %s158 = sphi 0, %s158
    %s160 = sphi 0, %s158
    %s161 = sphi 0, %s160
    %s175 = sphi 0, %s161
    %s179 = sphi 0, %s179
    %s181 = sphi 0, %s179
    %s182 = sphi 0, %s181
    %s196 = sphi 0, %s182
    %s202 = sphi 0, %s204
    %s205 = sphi 0, %s202
    %s206 = sphi 0, %s205
    %s222 = sphi 0, %s206
  $region4: #{einnet_forward.4} parent=0 // loop_header_branch
    %17 = sbr.rel (%p15) target = $region8
  $region5: #{einnet_forward.4} parent=0 // loop_body
    %s19 = ssub.s32 %s14, 1
    %s20 = ssub.s32 %s14, 2
    %s21 = sadd.s32 %s14, 1
    %s22 = ssub.s32 %s14, %s21
    %p23 = scmp.eq.s32.totalorder %s22, 0
    %s25 = sadd.s32 %s24, 1
    %s26 = scalar_select %p23, %s24, %s25
    %p29 = pneg %p23
    %p30 = scmp.eq.s32.totalorder %s14, 1
    %p31 = por %p29, %p30
    %p32 = scmp.ne.s32.totalorder %s24, %s27
    %p33 = scmp.eq.s32.totalorder %s14, 0
    %p34 = por %p32, %p33
    %p35 = scmp.ne.s32.totalorder %s24, %s27
    %p36 = scmp.eq.s32.totalorder %s19, 1
    %p37 = por %p35, %p36
    %p38 = scmp.ne.s32.totalorder %s27, %s28
    %p39 = scmp.eq.s32.totalorder %s19, 0
    %p40 = por %p38, %p39
    %p41 = scmp.ne.s32.totalorder %s27, %s28
    %p42 = scmp.eq.s32.totalorder %s20, 1
    %p43 = por %p41, %p42
    %p45 = scmp.ne.s32.totalorder %s28, %s44
    %p46 = scmp.eq.s32.totalorder %s20, 0
    %p47 = por %p45, %p46
    %s48 = ssub.s32 %s14, %s21
    %p49 = scmp.eq.s32.totalorder %s48, 0
    %s51 = sadd.s32 %s50, 1
    %s52 = scalar_select %p49, %s50, %s51
    %p55 = pneg %p49
    %p56 = scmp.eq.s32.totalorder %s14, 1
    %p57 = por %p55, %p56
    %p58 = scmp.ne.s32.totalorder %s50, %s53
    %p59 = scmp.eq.s32.totalorder %s14, 0
    %p60 = por %p58, %p59
    %p61 = scmp.ne.s32.totalorder %s50, %s53
    %p62 = scmp.eq.s32.totalorder %s19, 1
    %p63 = por %p61, %p62
    %p64 = scmp.ne.s32.totalorder %s53, %s54
    %p65 = scmp.eq.s32.totalorder %s19, 0
    %p66 = por %p64, %p65
    %p67 = scmp.ne.s32.totalorder %s53, %s54
    %p68 = scmp.eq.s32.totalorder %s20, 1
    %p69 = por %p67, %p68
    %p71 = scmp.ne.s32.totalorder %s54, %s70
    %p72 = scmp.eq.s32.totalorder %s20, 0
    %p73 = por %p71, %p72
    %s75 = sadd.s32 %s74, 1
    %p78 = scmp.eq.s32.totalorder %s14, 1
    %p79 = scmp.ne.s32.totalorder %s74, %s76
    %p80 = scmp.eq.s32.totalorder %s14, 0
    %p81 = por %p79, %p80
    %p82 = scmp.ne.s32.totalorder %s74, %s76
    %p83 = scmp.eq.s32.totalorder %s19, 1
    %p84 = por %p82, %p83
    %p85 = scmp.ne.s32.totalorder %s76, %s77
    %p86 = scmp.eq.s32.totalorder %s19, 0
    %p87 = por %p85, %p86
    %p88 = scmp.ne.s32.totalorder %s76, %s77
    %p89 = scmp.eq.s32.totalorder %s20, 1
    %p90 = por %p88, %p89
    %p92 = scmp.ne.s32.totalorder %s77, %s91
    %p93 = scmp.eq.s32.totalorder %s20, 0
    %p94 = por %p92, %p93
    %s96 = sadd.s32 %s95, 1
    %p99 = scmp.eq.s32.totalorder %s14, 1
    %p100 = scmp.ne.s32.totalorder %s95, %s97
    %p101 = scmp.eq.s32.totalorder %s14, 0
    %p102 = por %p100, %p101
    %p103 = scmp.ne.s32.totalorder %s95, %s97
    %p104 = scmp.eq.s32.totalorder %s19, 1
    %p105 = por %p103, %p104
    %p106 = scmp.ne.s32.totalorder %s97, %s98
    %p107 = scmp.eq.s32.totalorder %s19, 0
    %p108 = por %p106, %p107
    %p109 = scmp.ne.s32.totalorder %s97, %s98
    %p110 = scmp.eq.s32.totalorder %s20, 1
    %p111 = por %p109, %p110
    %p113 = scmp.ne.s32.totalorder %s98, %s112
    %p114 = scmp.eq.s32.totalorder %s20, 0
    %p115 = por %p113, %p114
    %s117 = sadd.s32 %s116, 1
    %p120 = scmp.eq.s32.totalorder %s14, 1
    %p121 = scmp.ne.s32.totalorder %s116, %s118
    %p122 = scmp.eq.s32.totalorder %s14, 0
    %p123 = por %p121, %p122
    %p124 = scmp.ne.s32.totalorder %s116, %s118
    %p125 = scmp.eq.s32.totalorder %s19, 1
    %p126 = por %p124, %p125
    %p127 = scmp.ne.s32.totalorder %s118, %s119
    %p128 = scmp.eq.s32.totalorder %s19, 0
    %p129 = por %p127, %p128
    %p130 = scmp.ne.s32.totalorder %s118, %s119
    %p131 = scmp.eq.s32.totalorder %s20, 1
    %p132 = por %p130, %p131
    %p134 = scmp.ne.s32.totalorder %s119, %s133
    %p135 = scmp.eq.s32.totalorder %s20, 0
    %p136 = por %p134, %p135
    %s138 = sadd.s32 %s137, 1
    %p141 = scmp.eq.s32.totalorder %s14, 1
    %p142 = scmp.ne.s32.totalorder %s137, %s139
    %p143 = scmp.eq.s32.totalorder %s14, 0
    %p144 = por %p142, %p143
    %p145 = scmp.ne.s32.totalorder %s137, %s139
    %p146 = scmp.eq.s32.totalorder %s19, 1
    %p147 = por %p145, %p146
    %p148 = scmp.ne.s32.totalorder %s139, %s140
    %p149 = scmp.eq.s32.totalorder %s19, 0
    %p150 = por %p148, %p149
    %p151 = scmp.ne.s32.totalorder %s139, %s140
    %p152 = scmp.eq.s32.totalorder %s20, 1
    %p153 = por %p151, %p152
    %p155 = scmp.ne.s32.totalorder %s140, %s154
    %p156 = scmp.eq.s32.totalorder %s20, 0
    %p157 = por %p155, %p156
    %s159 = sadd.s32 %s158, 1
    %p162 = scmp.eq.s32.totalorder %s14, 1
    %p163 = scmp.ne.s32.totalorder %s158, %s160
    %p164 = scmp.eq.s32.totalorder %s14, 0
    %p165 = por %p163, %p164
    %p166 = scmp.ne.s32.totalorder %s158, %s160
    %p167 = scmp.eq.s32.totalorder %s19, 1
    %p168 = por %p166, %p167
    %p169 = scmp.ne.s32.totalorder %s160, %s161
    %p170 = scmp.eq.s32.totalorder %s19, 0
    %p171 = por %p169, %p170
    %p172 = scmp.ne.s32.totalorder %s160, %s161
    %p173 = scmp.eq.s32.totalorder %s20, 1
    %p174 = por %p172, %p173
    %p176 = scmp.ne.s32.totalorder %s161, %s175
    %p177 = scmp.eq.s32.totalorder %s20, 0
    %p178 = por %p176, %p177
    %s180 = sadd.s32 %s179, 1
    %p183 = scmp.eq.s32.totalorder %s14, 1
    %p184 = scmp.ne.s32.totalorder %s179, %s181
    %p185 = scmp.eq.s32.totalorder %s14, 0
    %p186 = por %p184, %p185
    %p187 = scmp.ne.s32.totalorder %s179, %s181
    %p188 = scmp.eq.s32.totalorder %s19, 1
    %p189 = por %p187, %p188
    %p190 = scmp.ne.s32.totalorder %s181, %s182
    %p191 = scmp.eq.s32.totalorder %s19, 0
    %p192 = por %p190, %p191
    %p193 = scmp.ne.s32.totalorder %s181, %s182
    %p194 = scmp.eq.s32.totalorder %s20, 1
    %p195 = por %p193, %p194
    %p197 = scmp.ne.s32.totalorder %s182, %s196
    %p198 = scmp.eq.s32.totalorder %s20, 0
    %p199 = por %p197, %p198
    %s200 = ssub.s32 %s14, %s21
    %p201 = scmp.eq.s32.totalorder %s200, 0
    %s203 = sadd.s32 %s202, 1
    %s204 = scalar_select %p201, %s202, %s203
    %p207 = pneg %p201
    %p208 = scmp.eq.s32.totalorder %s14, 1
    %p209 = por %p207, %p208
    %p210 = scmp.ne.s32.totalorder %s202, %s205
    %p211 = scmp.eq.s32.totalorder %s14, 0
    %p212 = por %p210, %p211
    %p213 = scmp.ne.s32.totalorder %s202, %s205
    %p214 = scmp.eq.s32.totalorder %s19, 1
    %p215 = por %p213, %p214
    %p216 = scmp.ne.s32.totalorder %s205, %s206
    %p217 = scmp.eq.s32.totalorder %s19, 0
    %p218 = por %p216, %p217
    %p219 = scmp.ne.s32.totalorder %s205, %s206
    %p220 = scmp.eq.s32.totalorder %s20, 1
    %p221 = por %p219, %p220
    %p223 = scmp.ne.s32.totalorder %s206, %s222
    %p224 = scmp.eq.s32.totalorder %s20, 0
    %p225 = por %p223, %p224
    %p226 = scmp.le.s32.totalorder 1, %s14
    %p227 = scmp.lt.s32.totalorder %s14, 3
    %p228 = pnand %p226, %p227
    %p229 = pneg %p228
    // Predicated region
    $region9: #{einnet_forward.4} parent=5 // pred_check
      _
    $region10: #{einnet_forward.4} parent=5 // pred_check_branch
      %231 = sbr.rel (%p228) target = $region12
    $region11: #{einnet_forward.4} parent=5 // pred_region
      %s232 = ssub.s32 %s14, 1
      // Predicated region
      $region13: #{einnet_forward.4} parent=11 // pred_check
        %p233 = pneg %p87
      $region14: #{einnet_forward.4} parent=11 // pred_check_branch
        %235 = sbr.rel (%p233) target = $region16
      $region15: #{einnet_forward.4} parent=11 // pred_region
        _
      $region16: #{einnet_forward.4} parent=11 // pred_fallthru
        _
      // Predicated region
      $region17: #{einnet_forward.4} parent=11 // pred_check
        %p236 = pneg %p108
      $region18: #{einnet_forward.4} parent=11 // pred_check_branch
        %238 = sbr.rel (%p236) target = $region20
      $region19: #{einnet_forward.4} parent=11 // pred_region
        _
      $region20: #{einnet_forward.4} parent=11 // pred_fallthru
        _
      // Predicated region
      $region21: #{einnet_forward.4} parent=11 // pred_check
        %p239 = pneg %p129
      $region22: #{einnet_forward.4} parent=11 // pred_check_branch
        %241 = sbr.rel (%p239) target = $region24
      $region23: #{einnet_forward.4} parent=11 // pred_region
        _
      $region24: #{einnet_forward.4} parent=11 // pred_fallthru
        _
      // Predicated region
      $region25: #{einnet_forward.4} parent=11 // pred_check
        %p242 = pneg %p150
      $region26: #{einnet_forward.4} parent=11 // pred_check_branch
        %244 = sbr.rel (%p242) target = $region28
      $region27: #{einnet_forward.4} parent=11 // pred_region
        _
      $region28: #{einnet_forward.4} parent=11 // pred_fallthru
        _
      // Predicated region
      $region29: #{einnet_forward.4} parent=11 // pred_check
        %p245 = pneg %p171
      $region30: #{einnet_forward.4} parent=11 // pred_check_branch
        %247 = sbr.rel (%p245) target = $region32
      $region31: #{einnet_forward.4} parent=11 // pred_region
        _
      $region32: #{einnet_forward.4} parent=11 // pred_fallthru
        _
      // Predicated region
      $region33: #{einnet_forward.4} parent=11 // pred_check
        %p248 = pneg %p192
      $region34: #{einnet_forward.4} parent=11 // pred_check_branch
        %250 = sbr.rel (%p248) target = $region36
      $region35: #{einnet_forward.4} parent=11 // pred_region
        _
      $region36: #{einnet_forward.4} parent=11 // pred_fallthru
        _
    $region12: #{einnet_forward.4} parent=5 // pred_fallthru
      _
    %p251 = scmp.lt.s32.totalorder %s14, 2
    // Predicated region
    $region37: #{einnet_forward.4} parent=5 // pred_check
      %p252 = pneg %p251
    $region38: #{einnet_forward.4} parent=5 // pred_check_branch
      %254 = sbr.rel (%p252) target = $region40
    $region39: #{einnet_forward.4} parent=5 // pred_region
      // Predicated region
      $region41: #{einnet_forward.4} parent=39 // pred_check
        %p255 = pneg %p34
      $region42: #{einnet_forward.4} parent=39 // pred_check_branch
        %257 = sbr.rel (%p255) target = $region44
      $region43: #{einnet_forward.4} parent=39 // pred_region
        %p258 = scmp.lt.s32.totalorder %s14, 1
        %s259 = scalar_select %p258, %s14, 1
        %s260 = smul.addr %s259, 4
        %s261 = scalar_lea.vmem %s0, %s260
      $region44: #{einnet_forward.4} parent=39 // pred_fallthru
        _
      // Predicated region
      $region45: #{einnet_forward.4} parent=39 // pred_check
        %p262 = pneg %p60
      $region46: #{einnet_forward.4} parent=39 // pred_check_branch
        %264 = sbr.rel (%p262) target = $region48
      $region47: #{einnet_forward.4} parent=39 // pred_region
        %p265 = scmp.lt.s32.totalorder %s14, 1
        %s266 = scalar_select %p265, %s14, 1
        %s267 = smul.addr %s266, 8
        %s268 = scalar_lea.vmem %s1, %s267
      $region48: #{einnet_forward.4} parent=39 // pred_fallthru
        _
    $region40: #{einnet_forward.4} parent=5 // pred_fallthru
      _
    %p269 = scmp.le.s32.totalorder 1, %s14
    %p270 = scmp.lt.s32.totalorder %s14, 3
    %p271 = pnand %p269, %p270
    %p272 = pneg %p271
    // Predicated region
    $region49: #{einnet_forward.4} parent=5 // pred_check
      _
    $region50: #{einnet_forward.4} parent=5 // pred_check_branch
      %274 = sbr.rel (%p271) target = $region52
    $region51: #{einnet_forward.4} parent=5 // pred_region
      %s275 = ssub.s32 %s14, 1
      %p276 = scmp.lt.s32.totalorder %s19, 1
      %s277 = scalar_select %p276, %s19, 1
      %s278 = smul.addr %s277, 4
      %s279 = scalar_lea.vmem %s0, %s278
      %p280 = pneg %p40
      %p281 = pneg %p37
      %p282 = scmp.lt.s32.totalorder %s19, 1
      %s283 = scalar_select %p282, %s19, 1
      %s284 = smul.addr %s283, 8
      %s285 = scalar_lea.vmem %s1, %s284
      %p286 = pneg %p66
      %p287 = pneg %p63
      %p288 = pneg %p87
      %p289 = pneg %p84
      %p290 = pneg %p108
      %p291 = pneg %p105
      %p292 = pneg %p129
      %p293 = pneg %p126
      %p294 = pneg %p150
      %p295 = pneg %p147
      %p296 = pneg %p171
      %p297 = pneg %p168
      %p298 = pneg %p192
      %p299 = pneg %p189
      %p300 = pneg %p218
      %p301 = pneg %p215
      %p302 = scmp.lt.s32.totalorder %s19, 1
      %s303 = scalar_select %p302, %s19, 1
      %s304 = smul.addr %s303, 4
      %s305 = scalar_lea.vmem %s8, %s304
      %p306 = scmp.lt.s32.totalorder %s19, 1
      %s307 = scalar_select %p306, %s19, 1
      %s308 = smul.addr %s307, 4
      %s309 = scalar_lea.vmem %s0, %s308
      %p310 = scmp.lt.s32.totalorder %s19, 1
      %s311 = scalar_select %p310, %s19, 1
      %s312 = smul.addr %s311, 8
      %s313 = scalar_lea.vmem %s1, %s312
      %p314 = scmp.lt.s32.totalorder %s19, 1
      %s315 = scalar_select %p314, %s19, 1
      %s316 = smul.addr %s315, 4
      %s317 = scalar_lea.vmem %s8, %s316
      %v319 = vld [vmem:[%s313] sm:$0xff]
      %v320 = vld [vmem:[%s309] sm:$0xf]
      %v321 = vunpack.c.l.bf16 %v320
      %323 = vset.pattern.permute.xlu0 0
      %324 = vperm.xlu0 %323, %v319
      %v325 = vpop.permute.xlu0 %324
      %v327 = vmul.f32 %v321, %v325
      %v328 = vand.u32 2147483647, %v327
      %vm329 = vcmp.le.f32.partialorder %v328, 0.7853982
      %vm330 = vcmp.lt.s32.totalorder %v327, 0
      %v331 = vand.u32 %v327, 2139095040
      %v332 = vshrl.u32 %v331, 23
      %v333 = vsub.s32 %v332, 127
      %v334 = vand.u32 2147483647, %v327
      %v335 = vand.u32 %v334, 8388607
      %v336 = vor.u32 %v335, 8388608
      %v337 = vsub.s32 0, %v336
      %v338 = vadd.s32 %v333, 1
      %vm339 = vcmp.gt.s32.totalorder %v338, 0
      %v340 = vsel %vm339, %v338, 0
      %v341 = vshrl.u32 %v340, 5
      %v342 = vand.u32 %v340, 31
      %v343 = vsub.s32 32, %v342
      %v344 = vshrl.u32 683565275, %v343
      %v345 = vshll.u32 683565275, %v342
      %v346 = vshrl.u32 2475754826, %v343
      %v347 = vor.u32 %v345, %v346
      %v348 = vshll.u32 2475754826, %v342
      %v349 = vshrl.u32 2131351028, %v343
      %v350 = vor.u32 %v348, %v349
      %v351 = vshll.u32 2131351028, %v342
      %v352 = vshrl.u32 2102212464, %v343
      %v353 = vor.u32 %v351, %v352
      %v354 = vshll.u32 2102212464, %v342
      %v355 = vshrl.u32 920167782, %v343
      %v356 = vor.u32 %v354, %v355
      %v357 = vshll.u32 920167782, %v342
      %v358 = vshrl.u32 1326507024, %v343
      %v359 = vor.u32 %v357, %v358
      %vm360 = vcmp.lt.s32.totalorder %v341, 1
      %vm361 = vcmp.lt.s32.totalorder %v341, 2
      %vm362 = vcmp.lt.s32.totalorder %v341, 3
      %vm363 = vcmp.lt.s32.totalorder %v341, 4
      %v364 = vsel %vm360, %v344, %v347
      %v365 = vsel %vm363, %v353, 2102212464
      %v366 = vsel %vm362, %v350, %v365
      %v367 = vsel %vm361, %v364, %v366
      %v368 = vsel %vm360, %v347, %v350
      %v369 = vsel %vm363, %v356, 920167782
      %v370 = vsel %vm362, %v353, %v369
      %v371 = vsel %vm361, %v368, %v370
      %v372 = vsel %vm360, %v350, %v353
      %v373 = vsel %vm363, %v359, 1326507024
      %v374 = vsel %vm362, %v356, %v373
      %v375 = vsel %vm361, %v372, %v374
      %v376 = vshll.u32 %v336, 8
      %v377 = vmul.u32.u64.compose %v376, %v375
      %v378 = vextract.low.u32 %v377
      %v379 = vextract.high.u32 %v377
      %v380 = vmul.u32.u64.compose %v376, %v371
      %v381 = vextract.low.u32 %v380
      %v382 = vextract.high.u32 %v380
      %v383 = vmul.u32 %v376, %v367
      %v384 = vadd.s32 %v379, %v381
      %vm385 = vc.u32 %v379, %v381
      %v386 = vadd.s32 %v382, 1
      %v387 = vsel %vm385, %v386, %v382
      %v388 = vadd.s32 %v383, %v387
      %v389 = vadd.s32 %v388, 536870912
      %v390 = vshrl.u32 %v389, 30
      %v391 = vshll.u32 %v390, 30
      %v392 = vsub.s32 %v388, %v391
      %vm393 = vcmp.lt.s32.totalorder %v392, 0
      %v394 = vsub.s32 0, %v392
      %v395 = vsel %vm393, %v394, %v392
      %v396 = vclz %v395
      %v397 = vsub.s32 %v396, 2
      %vm398 = vcmp.gt.s32.totalorder 0, %v397
      %v399 = vsel %vm398, 0, %v397
      %v400 = vsub.s32 32, %v399
      %v401 = vshll.u32 %v392, %v399
      %v402 = vshrl.u32 %v384, %v400
      %v403 = vor.u32 %v401, %v402
      %v404 = vsub.s32 4294967266, %v399
      %v405 = vadd.s32 %v404, 127
      %v406 = vshll.u32 %v405, 23
      %v407 = vor.u32 4788187, %v406
      %v408 = vand.u32 2147483647, %v407
      %v410 = vcvt.s32.f32 %v403
      %v411 = vmul.f32 %v410, %v408
      %v412 = vxor.u32 %v411, 2147483648
      %v413 = vsel %vm330, %v412, %v411
      %v414 = vsub.s32 4, %v390
      %v415 = vsel %vm330, %v414, %v390
      %v416 = vsel %vm329, %v327, %v413
      %v417 = vsel %vm329, 0, %v415
      %v418 = vcosq.f32.pop %v416
      %v419 = vsinq.f32.pop %v416
      %vm420 = vweird.f32 %v327
      %v421 = vadd.s32 %v417, 3
      %v422 = vand.u32 %v421, 3
      %vm423 = vcmp.lt.s32.totalorder %v422, 2
      %vm424 = vcmp.eq.s32.totalorder %v422, 0
      %v425 = vxor.u32 %v419, 2147483648
      %v426 = vsel %vm424, %v418, %v425
      %vm427 = vcmp.eq.s32.totalorder %v422, 2
      %v428 = vxor.u32 %v418, 2147483648
      %v429 = vsel %vm427, %v428, %v419
      %v430 = vsel %vm423, %v426, %v429
      %v431 = vsel %vm420, nan, %v430
      %v432 = vmul.f32 %v431, %v325
      %v433 = vmax.f32 %v319, 1e-12
      %v434 = vrcp.pop %v433
      %v435 = vmul.f32 1.0, %v434
      %437 = vset.pattern.permute.xlu0 0
      %438 = vperm.xlu0 %437, %v435
      %v439 = vpop.permute.xlu0 %438
      %v441 = vmul.f32 %v432, %v439
      %v442 = vpack.c.bf16 %v441, %v441
      %v443 = vld [vmem:[%s2] sm:$0xf]
      %v444 = vld [vmem:[%s2 + $0x4] sm:$0xf]
      %v445 = vld [vmem:[%s2 + $0x8] sm:$0xf]
      %v446 = vld [vmem:[%s2 + $0xc] sm:$0xf]
      %v447 = vld [vmem:[%s3] sm:$0xff]
      %v448 = vld [vmem:[%s3 + $0x8] sm:$0xff]
      %v449 = vld [vmem:[%s3 + $0x10] sm:$0xff]
      %v450 = vld [vmem:[%s3 + $0x18] sm:$0xff]
      %v451 = vld [vmem:[%s3 + $0x20] sm:$0xff]
      %v452 = vld [vmem:[%s3 + $0x28] sm:$0xff]
      %v453 = vld [vmem:[%s3 + $0x30] sm:$0xff]
      %v454 = vld [vmem:[%s3 + $0x38] sm:$0xff]
      %v455 = vld [vmem:[%s3 + $0x40] sm:$0xff]
      %v456 = vld [vmem:[%s3 + $0x48] sm:$0xff]
      %v457 = vld [vmem:[%s3 + $0x50] sm:$0xff]
      %v458 = vld [vmem:[%s3 + $0x58] sm:$0xff]
      %vm459 = vcmask 261120
      %v460 = vsel %vm459, %v432, 0.0
      %v461 = vrot.slane %v460, 4
      %v462 = vadd.f32 %v460, %v461
      %v463 = vrot.slane %v462, 2
      %v464 = vadd.f32 %v462, %v463
      %v465 = vrot.slane %v464, 1
      %v466 = vadd.f32 %v464, %v465
      %vm467 = vcmask 7168
      %v468 = vsel %vm467, %v319, 0.0
      %v469 = vrot.slane %v468, 4
      %v470 = vadd.f32 %v468, %v469
      %v471 = vrot.slane %v470, 2
      %v472 = vadd.f32 %v470, %v471
      %v473 = vrot.slane %v472, 1
      %v474 = vadd.f32 %v472, %v473
      %v475 = vmax.f32 %v474, 1e-12
      %v476 = vrcp.pop %v475
      %v477 = vmul.f32 1.0, %v476
      %479 = vset.pattern.permute.xlu0 0
      %480 = vperm.xlu0 %479, %v477
      %v481 = vpop.permute.xlu0 %480
      %v483 = vmul.f32 %v466, %v481
      %v485 = vsel %vm459, %v483, 0
      %487 = vmatprep.subr.mxu0 0.0
      %488 = vmatpush1.msra.mxu0 %v447
      %489 = vmatprep.subr.mxu0 0.0
      %490 = vmatpush1.msra.mxu0 %v448
      %491 = vmatprep.subr.mxu0 0.0
      %492 = vmatpush1.msra.mxu0 %v449
      %493 = vmatprep.subr.mxu0 0.0
      %494 = vmatpush1.msra.mxu0 %v450
      %495 = vmatprep.subr.mxu0 0.0
      %496 = vmatpush1.msra.mxu0 0.0
      %497 = vmatprep.subr.mxu0 0.0
      %498 = vmatpush1.msra.mxu0 0.0
      %499 = vmatprep.subr.mxu0 0.0
      %500 = vmatpush1.msra.mxu0 0.0
      %501 = vmatprep.subr.mxu0 0.0
      %502 = vmatpush1.msra.mxu0 0.0
      %503 = vmatprep.subr.mxu0 0.0
      %504 = vmatpush1.msra.mxu0 0.0
      %505 = vmatprep.subr.mxu0 0.0
      %506 = vmatpush1.msra.mxu0 0.0
      %507 = vmatprep.subr.mxu0 0.0
      %508 = vmatpush1.msra.mxu0 0.0
      %509 = vmatprep.subr.mxu0 0.0
      %510 = vmatpush1.msra.mxu0 0.0
      %511 = vmatprep.subr.mxu0 0.0
      %512 = vmatpush1.msra.mxu0 0.0
      %513 = vmatprep.subr.mxu0 0.0
      %514 = vmatpush1.msra.mxu0 0.0
      %515 = vmatprep.subr.mxu0 0.0
      %516 = vmatpush1.msra.mxu0 0.0
      %517 = vmatprep.subr.mxu0 0.0
      %518 = vmatpush1.msra.mxu0 0.0
      %519 = vmatprep.subr.mxu0 0.0
      %520 = vmatpush1.msra.mxu0 0.0
      %521 = vmatprep.subr.mxu0 0.0
      %522 = vmatpush1.msra.mxu0 0.0
      %523 = vmatprep.subr.mxu0 0.0
      %524 = vmatpush1.msra.mxu0 0.0
      %525 = vmatprep.subr.mxu0 0.0
      %526 = vmatpush1.msra.mxu0 0.0
      %527 = vmatprep.subr.mxu0 0.0
      %528 = vmatpush1.msra.mxu0 0.0
      %529 = vmatprep.subr.mxu0 0.0
      %530 = vmatpush1.msra.mxu0 0.0
      %531 = vmatprep.subr.mxu0 0.0
      %532 = vmatpush1.msra.mxu0 0.0
      %533 = vmatprep.subr.mxu0 0.0
      %534 = vmatpush1.msra.mxu0 0.0
      %535 = vmatprep.subr.mxu0 0.0
      %536 = vmatpush1.msra.mxu0 0.0
      %537 = vmatprep.subr.mxu0 0.0
      %538 = vmatpush1.msra.mxu0 0.0
      %539 = vmatprep.subr.mxu0 0.0
      %540 = vmatpush1.msra.mxu0 0.0
      %541 = vmatprep.subr.mxu0 0.0
      %542 = vmatpush1.msra.mxu0 0.0
      %543 = vmatprep.subr.mxu0 0.0
      %544 = vmatpush1.msra.mxu0 0.0
      %545 = vmatprep.subr.mxu0 0.0
      %546 = vmatpush1.msra.mxu0 0.0
      %547 = vmatprep.subr.mxu0 0.0
      %548 = vmatpush1.msra.mxu0 0.0
      %549 = vmatprep.subr.mxu0 0.0
      %550 = vmatpush1.msra.mxu0 0.0
      %551 = vmatprep.mubr.f32.mxu0 0.0
      %552 = vmatmul.mubr.f32.gmra.mrb[0].mxu0 %v485
      %v553 = vpop.f32.mrb[0].mxu0
      %v554 = vadd.f32 0.0, %v553
      %v555 = vpop.f32.mrb[0].mxu0
      %556 = vdwg.mxu0
      %v557 = vlaneseq
      %v558 = vshrl.u32 %v557, 7
      %v559 = vsub.s32 0, %v558
      %v560 = vrot.slane %v554, %v559
      %v565 = vunpack.c.l.b16 %v443
      %v566 = vunpack.c.l.b16 %v444
      %v567 = vunpack.c.l.b16 %v445
      %v568 = vunpack.c.l.b16 %v446
      %v569 = vpack.c.b16 %v566, %v565
      %v570 = vpack.c.b16 %v568, %v567
      %v574 = vsel %vm459, %v442, 0
      %576 = vmatprep.subr.bf16.mxu0 0
      %577 = vmatpush1.bf16.msra.mxu0 %v569
      %578 = vmatprep.subr.bf16.mxu0 0
      %579 = vmatpush1.bf16.msra.mxu0 %v570
      %580 = vmatprep.subr.bf16.mxu0 0
      %581 = vmatpush1.bf16.msra.mxu0 0
      %582 = vmatprep.subr.bf16.mxu0 0
      %583 = vmatpush1.bf16.msra.mxu0 0
      %584 = vmatprep.subr.bf16.mxu0 0
      %585 = vmatpush1.bf16.msra.mxu0 0
      %586 = vmatprep.subr.bf16.mxu0 0
      %587 = vmatpush1.bf16.msra.mxu0 0
      %588 = vmatprep.subr.bf16.mxu0 0
      %589 = vmatpush1.bf16.msra.mxu0 0
      %590 = vmatprep.subr.bf16.mxu0 0
      %591 = vmatpush1.bf16.msra.mxu0 0
      %592 = vmatprep.subr.bf16.mxu0 0
      %593 = vmatpush1.bf16.msra.mxu0 0
      %594 = vmatprep.subr.bf16.mxu0 0
      %595 = vmatpush1.bf16.msra.mxu0 0
      %596 = vmatprep.subr.bf16.mxu0 0
      %597 = vmatpush1.bf16.msra.mxu0 0
      %598 = vmatprep.subr.bf16.mxu0 0
      %599 = vmatpush1.bf16.msra.mxu0 0
      %600 = vmatprep.subr.bf16.mxu0 0
      %601 = vmatpush1.bf16.msra.mxu0 0
      %602 = vmatprep.subr.bf16.mxu0 0
      %603 = vmatpush1.bf16.msra.mxu0 0
      %604 = vmatprep.subr.bf16.mxu0 0
      %605 = vmatpush1.bf16.msra.mxu0 0
      %606 = vmatprep.subr.bf16.mxu0 0
      %607 = vmatpush1.bf16.msra.mxu0 0
      %608 = vmatprep.mubr.bf16.mxu0 0
      %609 = vmatmul.mubr.bf16.gmra.mrb[0].mxu0 %v574
      %v610 = vpop.f32.mrb[0].mxu0
      %v611 = vadd.f32 %v560, %v610
      %v612 = vpop.f32.mrb[0].mxu0
      %v613 = vpop.f32.mrb[0].mxu0
      %v614 = vpop.f32.mrb[0].mxu0
      %615 = vdwg.mxu0
      %v616 = vmul.f32 %v432, %v432
      %v617 = vsel %vm459, %v616, 0.0
      %v618 = vrot.slane %v617, 4
      %v619 = vadd.f32 %v617, %v618
      %v620 = vrot.slane %v619, 2
      %v621 = vadd.f32 %v619, %v620
      %v622 = vrot.slane %v621, 1
      %v623 = vadd.f32 %v621, %v622
      %v624 = vmul.f32 %v319, %v319
      %v625 = vsel %vm467, %v624, 0.0
      %v626 = vrot.slane %v625, 4
      %v627 = vadd.f32 %v625, %v626
      %v628 = vrot.slane %v627, 2
      %v629 = vadd.f32 %v627, %v628
      %v630 = vrot.slane %v629, 1
      %v631 = vadd.f32 %v629, %v630
      %v632 = vmax.f32 %v631, 1e-12
      %v633 = vrcp.pop %v632
      %v634 = vmul.f32 1.0, %v633
      %636 = vset.pattern.permute.xlu0 0
      %637 = vperm.xlu0 %636, %v634
      %v638 = vpop.permute.xlu0 %637
      %v640 = vmul.f32 %v623, %v638
      %v642 = vsel %vm459, %v640, 0
      %644 = vmatprep.subr.mxu0 0.0
      %645 = vmatpush1.msra.mxu0 %v451
      %646 = vmatprep.subr.mxu0 0.0
      %647 = vmatpush1.msra.mxu0 %v452
      %648 = vmatprep.subr.mxu0 0.0
      %649 = vmatpush1.msra.mxu0 %v453
      %650 = vmatprep.subr.mxu0 0.0
      %651 = vmatpush1.msra.mxu0 %v454
      %652 = vmatprep.subr.mxu0 0.0
      %653 = vmatpush1.msra.mxu0 0.0
      %654 = vmatprep.subr.mxu0 0.0
      %655 = vmatpush1.msra.mxu0 0.0
      %656 = vmatprep.subr.mxu0 0.0
      %657 = vmatpush1.msra.mxu0 0.0
      %658 = vmatprep.subr.mxu0 0.0
      %659 = vmatpush1.msra.mxu0 0.0
      %660 = vmatprep.subr.mxu0 0.0
      %661 = vmatpush1.msra.mxu0 0.0
      %662 = vmatprep.subr.mxu0 0.0
      %663 = vmatpush1.msra.mxu0 0.0
      %664 = vmatprep.subr.mxu0 0.0
      %665 = vmatpush1.msra.mxu0 0.0
      %666 = vmatprep.subr.mxu0 0.0
      %667 = vmatpush1.msra.mxu0 0.0
      %668 = vmatprep.subr.mxu0 0.0
      %669 = vmatpush1.msra.mxu0 0.0
      %670 = vmatprep.subr.mxu0 0.0
      %671 = vmatpush1.msra.mxu0 0.0
      %672 = vmatprep.subr.mxu0 0.0
      %673 = vmatpush1.msra.mxu0 0.0
      %674 = vmatprep.subr.mxu0 0.0
      %675 = vmatpush1.msra.mxu0 0.0
      %676 = vmatprep.subr.mxu0 0.0
      %677 = vmatpush1.msra.mxu0 0.0
      %678 = vmatprep.subr.mxu0 0.0
      %679 = vmatpush1.msra.mxu0 0.0
      %680 = vmatprep.subr.mxu0 0.0
      %681 = vmatpush1.msra.mxu0 0.0
      %682 = vmatprep.subr.mxu0 0.0
      %683 = vmatpush1.msra.mxu0 0.0
      %684 = vmatprep.subr.mxu0 0.0
      %685 = vmatpush1.msra.mxu0 0.0
      %686 = vmatprep.subr.mxu0 0.0
      %687 = vmatpush1.msra.mxu0 0.0
      %688 = vmatprep.subr.mxu0 0.0
      %689 = vmatpush1.msra.mxu0 0.0
      %690 = vmatprep.subr.mxu0 0.0
      %691 = vmatpush1.msra.mxu0 0.0
      %692 = vmatprep.subr.mxu0 0.0
      %693 = vmatpush1.msra.mxu0 0.0
      %694 = vmatprep.subr.mxu0 0.0
      %695 = vmatpush1.msra.mxu0 0.0
      %696 = vmatprep.subr.mxu0 0.0
      %697 = vmatpush1.msra.mxu0 0.0
      %698 = vmatprep.subr.mxu0 0.0
      %699 = vmatpush1.msra.mxu0 0.0
      %700 = vmatprep.subr.mxu0 0.0
      %701 = vmatpush1.msra.mxu0 0.0
      %702 = vmatprep.subr.mxu0 0.0
      %703 = vmatpush1.msra.mxu0 0.0
      %704 = vmatprep.subr.mxu0 0.0
      %705 = vmatpush1.msra.mxu0 0.0
      %706 = vmatprep.subr.mxu0 0.0
      %707 = vmatpush1.msra.mxu0 0.0
      %708 = vmatprep.mubr.f32.mxu0 0.0
      %709 = vmatmul.mubr.f32.gmra.mrb[0].mxu0 %v642
      %v710 = vpop.f32.mrb[0].mxu0
      %v711 = vadd.f32 0.0, %v710
      %v712 = vpop.f32.mrb[0].mxu0
      %713 = vdwg.mxu0
      %v714 = vlaneseq
      %v715 = vshrl.u32 %v714, 7
      %v716 = vsub.s32 0, %v715
      %v717 = vrot.slane %v711, %v716
      %v718 = vadd.f32 %v611, %v717
      %719 = vadd.xlane.f32.xlu0 %v460
      %v720 = vpop.xlane.xlu0 %719
      %v721 = vmul.f32 %v432, %v720
      %v722 = vsel %vm459, %v721, 0.0
      %v723 = vrot.slane %v722, 4
      %v724 = vadd.f32 %v722, %v723
      %v725 = vrot.slane %v724, 2
      %v726 = vadd.f32 %v724, %v725
      %v727 = vrot.slane %v726, 1
      %v728 = vadd.f32 %v726, %v727
      %v729 = vmul.f32 %v631, 32.0
      %v730 = vmax.f32 %v729, 1e-12
      %v731 = vrcp.pop %v730
      %v732 = vmul.f32 1.0, %v731
      %734 = vset.pattern.permute.xlu0 0
      %735 = vperm.xlu0 %734, %v732
      %v736 = vpop.permute.xlu0 %735
      %v738 = vmul.f32 %v728, %v736
      %v740 = vsel %vm459, %v738, 0
      %742 = vmatprep.subr.mxu0 0.0
      %743 = vmatpush1.msra.mxu0 %v455
      %744 = vmatprep.subr.mxu0 0.0
      %745 = vmatpush1.msra.mxu0 %v456
      %746 = vmatprep.subr.mxu0 0.0
      %747 = vmatpush1.msra.mxu0 %v457
      %748 = vmatprep.subr.mxu0 0.0
      %749 = vmatpush1.msra.mxu0 %v458
      %750 = vmatprep.subr.mxu0 0.0
      %751 = vmatpush1.msra.mxu0 0.0
      %752 = vmatprep.subr.mxu0 0.0
      %753 = vmatpush1.msra.mxu0 0.0
      %754 = vmatprep.subr.mxu0 0.0
      %755 = vmatpush1.msra.mxu0 0.0
      %756 = vmatprep.subr.mxu0 0.0
      %757 = vmatpush1.msra.mxu0 0.0
      %758 = vmatprep.subr.mxu0 0.0
      %759 = vmatpush1.msra.mxu0 0.0
      %760 = vmatprep.subr.mxu0 0.0
      %761 = vmatpush1.msra.mxu0 0.0
      %762 = vmatprep.subr.mxu0 0.0
      %763 = vmatpush1.msra.mxu0 0.0
      %764 = vmatprep.subr.mxu0 0.0
      %765 = vmatpush1.msra.mxu0 0.0
      %766 = vmatprep.subr.mxu0 0.0
      %767 = vmatpush1.msra.mxu0 0.0
      %768 = vmatprep.subr.mxu0 0.0
      %769 = vmatpush1.msra.mxu0 0.0
      %770 = vmatprep.subr.mxu0 0.0
      %771 = vmatpush1.msra.mxu0 0.0
      %772 = vmatprep.subr.mxu0 0.0
      %773 = vmatpush1.msra.mxu0 0.0
      %774 = vmatprep.subr.mxu0 0.0
      %775 = vmatpush1.msra.mxu0 0.0
      %776 = vmatprep.subr.mxu0 0.0
      %777 = vmatpush1.msra.mxu0 0.0
      %778 = vmatprep.subr.mxu0 0.0
      %779 = vmatpush1.msra.mxu0 0.0
      %780 = vmatprep.subr.mxu0 0.0
      %781 = vmatpush1.msra.mxu0 0.0
      %782 = vmatprep.subr.mxu0 0.0
      %783 = vmatpush1.msra.mxu0 0.0
      %784 = vmatprep.subr.mxu0 0.0
      %785 = vmatpush1.msra.mxu0 0.0
      %786 = vmatprep.subr.mxu0 0.0
      %787 = vmatpush1.msra.mxu0 0.0
      %788 = vmatprep.subr.mxu0 0.0
      %789 = vmatpush1.msra.mxu0 0.0
      %790 = vmatprep.subr.mxu0 0.0
      %791 = vmatpush1.msra.mxu0 0.0
      %792 = vmatprep.subr.mxu0 0.0
      %793 = vmatpush1.msra.mxu0 0.0
      %794 = vmatprep.subr.mxu0 0.0
      %795 = vmatpush1.msra.mxu0 0.0
      %796 = vmatprep.subr.mxu0 0.0
      %797 = vmatpush1.msra.mxu0 0.0
      %798 = vmatprep.subr.mxu0 0.0
      %799 = vmatpush1.msra.mxu0 0.0
      %800 = vmatprep.subr.mxu0 0.0
      %801 = vmatpush1.msra.mxu0 0.0
      %802 = vmatprep.subr.mxu0 0.0
      %803 = vmatpush1.msra.mxu0 0.0
      %804 = vmatprep.subr.mxu0 0.0
      %805 = vmatpush1.msra.mxu0 0.0
      %806 = vmatprep.mubr.f32.mxu0 0.0
      %807 = vmatmul.mubr.f32.gmra.mrb[0].mxu0 %v740
      %v808 = vpop.f32.mrb[0].mxu0
      %v809 = vadd.f32 0.0, %v808
      %v810 = vpop.f32.mrb[0].mxu0
      %811 = vdwg.mxu0
      %v812 = vlaneseq
      %v813 = vshrl.u32 %v812, 7
      %v814 = vsub.s32 0, %v813
      %v815 = vrot.slane %v809, %v814
      %v816 = vadd.f32 %v718, %v815
      %v817 = vld [vmem:[%s4] sm:$0x7f]
      %v818 = vmul.f32 %v319, 32.0
      %v819 = vmax.f32 %v818, 1e-12
      %v820 = vrcp.pop %v819
      %v821 = vmul.f32 1.0, %v820
      %v822 = vmul.f32 %v720, %v821
      %824 = vset.pattern.permute.xlu0 0
      %825 = vperm.xlu0 %824, %v822
      %v826 = vpop.permute.xlu0 %825
      %v828 = vlaneseq
      %v829 = vshrl.u32 %v828, 7
      %v830 = vsub.s32 0, %v829
      %v831 = vrot.slane %v817, %v830
      %v832 = vmul.f32 %v826, %v831
      %v833 = vadd.f32 %v816, %v832
      %v834 = vsel %vm459, %v466, 0.0
      %835 = vadd.xlane.f32.xlu0 %v834
      %v836 = vpop.xlane.xlu0 %835
      %v837 = vmul.f32 %v474, 32.0
      %v838 = vmax.f32 %v837, 1e-12
      %v839 = vrcp.pop %v838
      %v840 = vmul.f32 1.0, %v839
      %v841 = vmul.f32 %v836, %v840
      %843 = vset.pattern.permute.xlu0 0
      %844 = vperm.xlu0 %843, %v841
      %v845 = vpop.permute.xlu0 %844
      %v847 = vmul.f32 %v845, %v817
      %v848 = vlaneseq
      %v849 = vshrl.u32 %v848, 7
      %v850 = vsub.s32 1, %v849
      %v851 = vrot.slane %v847, %v850
      %v852 = vadd.f32 %v833, %v851
      %853 = vadd.xlane.f32.xlu0 %v617
      %v854 = vpop.xlane.xlu0 %853
      %v855 = vmul.f32 %v624, 32.0
      %v856 = vmax.f32 %v855, 1e-12
      %v857 = vrcp.pop %v856
      %v858 = vmul.f32 1.0, %v857
      %v859 = vmul.f32 %v854, %v858
      %861 = vset.pattern.permute.xlu0 0
      %862 = vperm.xlu0 %861, %v859
      %v863 = vpop.permute.xlu0 %862
      %v865 = vlaneseq
      %v866 = vshrl.u32 %v865, 7
      %v867 = vsub.s32 2, %v866
      %v868 = vrot.slane %v817, %v867
      %v869 = vmul.f32 %v863, %v868
      %v870 = vadd.f32 %v852, %v869
      %v871 = vrot.slane %v854, 4
      %v872 = vadd.f32 %v854, %v871
      %v873 = vrot.slane %v872, 2
      %v874 = vadd.f32 %v872, %v873
      %v875 = vrot.slane %v874, 1
      %v876 = vadd.f32 %v874, %v875
      %v877 = vmul.f32 %v876, %v732
      %879 = vset.pattern.permute.xlu0 0
      %880 = vperm.xlu0 %879, %v877
      %v881 = vpop.permute.xlu0 %880
      %v883 = vmul.f32 %v881, %v817
      %v884 = vlaneseq
      %v885 = vshrl.u32 %v884, 7
      %v886 = vsub.s32 3, %v885
      %v887 = vrot.slane %v883, %v886
      %v888 = vadd.f32 %v870, %v887
      %v889 = vmul.f32 %v720, %v720
      %v890 = vrot.slane %v889, 4
      %v891 = vadd.f32 %v889, %v890
      %v892 = vrot.slane %v891, 2
      %v893 = vadd.f32 %v891, %v892
      %v894 = vrot.slane %v893, 1
      %v895 = vadd.f32 %v893, %v894
      %v896 = vmul.f32 %v631, 1024.0
      %v897 = vmax.f32 %v896, 1e-12
      %v898 = vrcp.pop %v897
      %v899 = vmul.f32 1.0, %v898
      %v900 = vmul.f32 %v895, %v899
      %902 = vset.pattern.permute.xlu0 0
      %903 = vperm.xlu0 %902, %v900
      %v904 = vpop.permute.xlu0 %903
      %v906 = vmul.f32 %v904, %v817
      %v907 = vlaneseq
      %v908 = vshrl.u32 %v907, 7
      %v909 = vsub.s32 4, %v908
      %v910 = vrot.slane %v906, %v909
      %v911 = vadd.f32 %v888, %v910
      %v912 = vmul.f32 %v432, %v466
      %v913 = vsel %vm459, %v912, 0.0
      %914 = vadd.xlane.f32.xlu0 %v913
      %v915 = vpop.xlane.xlu0 %914
      %v916 = vmul.f32 %v474, %v319
      %v917 = vmul.f32 %v916, 32.0
      %v918 = vmax.f32 %v917, 1e-12
      %v919 = vrcp.pop %v918
      %v920 = vmul.f32 1.0, %v919
      %v921 = vmul.f32 %v915, %v920
      %923 = vset.pattern.permute.xlu0 0
      %924 = vperm.xlu0 %923, %v921
      %v925 = vpop.permute.xlu0 %924
      %v927 = vlaneseq
      %v928 = vshrl.u32 %v927, 7
      %v929 = vsub.s32 5, %v928
      %v930 = vrot.slane %v817, %v929
      %v931 = vmul.f32 %v925, %v930
      %v932 = vadd.f32 %v911, %v931
      %v933 = vmul.f32 %v466, %v466
      %v934 = vsel %vm459, %v933, 0.0
      %935 = vadd.xlane.f32.xlu0 %v934
      %v936 = vpop.xlane.xlu0 %935
      %v937 = vmul.f32 %v474, %v474
      %v938 = vmul.f32 %v937, 32.0
      %v939 = vmax.f32 %v938, 1e-12
      %v940 = vrcp.pop %v939
      %v941 = vmul.f32 1.0, %v940
      %v942 = vmul.f32 %v936, %v941
      %944 = vset.pattern.permute.xlu0 0
      %945 = vperm.xlu0 %944, %v942
      %v946 = vpop.permute.xlu0 %945
      %v948 = vmul.f32 %v946, %v817
      %v949 = vlaneseq
      %v950 = vshrl.u32 %v949, 7
      %v951 = vsub.s32 6, %v950
      %v952 = vrot.slane %v948, %v951
      %v953 = vadd.f32 %v932, %v952
      %v954 = vld [vmem:[%s5] sm:$0x1]
      %v956 = vlaneseq
      %v957 = vshrl.u32 %v956, 7
      %v958 = vsub.s32 0, %v957
      %v959 = vrot.slane %v954, %v958
      %v961 = vadd.f32 %v953, %v959
      %v962 = vmul.f32 %v961, 0.5
      %v963 = vmul.f32 %v961, 0.044715
      %v964 = vmul.f32 %v963, %v961
      %v965 = vmul.f32 %v964, %v961
      %v966 = vadd.f32 %v961, %v965
      %v967 = vmul.f32 %v966, 0.7978846
      %v968 = vtanh.pop %v967
      %v969 = vadd.f32 %v968, 1.0
      %v970 = vmul.f32 %v962, %v969
      %v971 = vld [vmem:[%s6] sm:$0xf]
      %v972 = vld [vmem:[%s6 + $0x4] sm:$0xf]
      %v973 = vld [vmem:[%s6 + $0x8] sm:$0xf]
      %v974 = vld [vmem:[%s6 + $0xc] sm:$0xf]
      %v975 = vld [vmem:[%s7] sm:$0x1]
      %v976 = vpack.c.bf16 %v970, %v970
      %v978 = vlaneseq
      %v979 = vshrl.u32 %v978, 7
      %v980 = vsub.s32 0, %v979
      %v981 = vrot.slane %v975, %v980
      %v987 = vunpack.c.l.b16 %v971
      %v988 = vunpack.c.l.b16 %v972
      %v989 = vunpack.c.l.b16 %v973
      %v990 = vunpack.c.l.b16 %v974
      %v991 = vpack.c.b16 %v988, %v987
      %v992 = vpack.c.b16 %v990, %v989
      %v996 = vsel %vm459, %v976, 0
      %998 = vmatprep.subr.bf16.mxu0 0
      %999 = vmatpush1.bf16.msra.mxu0 %v991
      %1000 = vmatprep.subr.bf16.mxu0 0
      %1001 = vmatpush1.bf16.msra.mxu0 %v992
      %1002 = vmatprep.subr.bf16.mxu0 0
      %1003 = vmatpush1.bf16.msra.mxu0 0
      %1004 = vmatprep.subr.bf16.mxu0 0
      %1005 = vmatpush1.bf16.msra.mxu0 0
      %1006 = vmatprep.subr.bf16.mxu0 0
      %1007 = vmatpush1.bf16.msra.mxu0 0
      %1008 = vmatprep.subr.bf16.mxu0 0
      %1009 = vmatpush1.bf16.msra.mxu0 0
      %1010 = vmatprep.subr.bf16.mxu0 0
      %1011 = vmatpush1.bf16.msra.mxu0 0
      %1012 = vmatprep.subr.bf16.mxu0 0
      %1013 = vmatpush1.bf16.msra.mxu0 0
      %1014 = vmatprep.subr.bf16.mxu0 0
      %1015 = vmatpush1.bf16.msra.mxu0 0
      %1016 = vmatprep.subr.bf16.mxu0 0
      %1017 = vmatpush1.bf16.msra.mxu0 0
      %1018 = vmatprep.subr.bf16.mxu0 0
      %1019 = vmatpush1.bf16.msra.mxu0 0
      %1020 = vmatprep.subr.bf16.mxu0 0
      %1021 = vmatpush1.bf16.msra.mxu0 0
      %1022 = vmatprep.subr.bf16.mxu0 0
      %1023 = vmatpush1.bf16.msra.mxu0 0
      %1024 = vmatprep.subr.bf16.mxu0 0
      %1025 = vmatpush1.bf16.msra.mxu0 0
      %1026 = vmatprep.subr.bf16.mxu0 0
      %1027 = vmatpush1.bf16.msra.mxu0 0
      %1028 = vmatprep.subr.bf16.mxu0 0
      %1029 = vmatpush1.bf16.msra.mxu0 0
      %1030 = vmatprep.mubr.bf16.mxu0 0
      %1031 = vmatmul.mubr.bf16.gmra.mrb[0].mxu0 %v996
      %v1032 = vpop.f32.mrb[0].mxu0
      %v1033 = vadd.f32 %v981, %v1032
      %v1034 = vpop.f32.mrb[0].mxu0
      %v1035 = vpop.f32.mrb[0].mxu0
      %v1036 = vpop.f32.mrb[0].mxu0
      %1037 = vdwg.mxu0
      %v1038 = vmul.f32 %v1033, %v325
      %v1039 = vadd.f32 %v1038, %v327
      %v1040 = vpack.c.bf16 %v1039, %v1039
      %vm1041 = vcmask 257024
      %1042 = vst.msk [vmem:[%s317] sm:$0xf] %vm1041, %v1040
      %p1043 = scmp.lt.s32.totalorder %s19, 1
      %s1044 = scalar_select %p1043, %s19, 1
      %s1045 = smul.addr %s1044, 4
      %s1046 = scalar_lea.vmem %s8, %s1045
      // Predicated region
      $region53: #{einnet_forward.4} parent=51 // pred_check
        %p1047 = pneg %p215
      $region54: #{einnet_forward.4} parent=51 // pred_check_branch
        %1049 = sbr.rel (%p1047) target = $region56
      $region55: #{einnet_forward.4} parent=51 // pred_region
        _
      $region56: #{einnet_forward.4} parent=51 // pred_fallthru
        _
    $region52: #{einnet_forward.4} parent=5 // pred_fallthru
      _
    %p1050 = scmp.le.s32.totalorder 2, %s14
    // Predicated region
    $region57: #{einnet_forward.4} parent=5 // pred_check
      %p1051 = pneg %p1050
    $region58: #{einnet_forward.4} parent=5 // pred_check_branch
      %1053 = sbr.rel (%p1051) target = $region60
    $region59: #{einnet_forward.4} parent=5 // pred_region
      %s1054 = ssub.s32 %s14, 2
      // Predicated region
      $region61: #{einnet_forward.4} parent=59 // pred_check
        %p1055 = pneg %p221
      $region62: #{einnet_forward.4} parent=59 // pred_check_branch
        %1057 = sbr.rel (%p1055) target = $region64
      $region63: #{einnet_forward.4} parent=59 // pred_region
        %p1058 = scmp.lt.s32.totalorder %s20, 1
        %s1059 = scalar_select %p1058, %s20, 1
        %s1060 = smul.addr %s1059, 4
        %s1061 = scalar_lea.vmem %s8, %s1060
      $region64: #{einnet_forward.4} parent=59 // pred_fallthru
        _
    $region60: #{einnet_forward.4} parent=5 // pred_fallthru
      _
  $region6: #{einnet_forward.4} parent=0 // loop_footer
    %s18 = sadd.s32 1, %s14
  $region7: #{einnet_forward.4} parent=0 // loop_footer_branch
    %13 = sbr.rel target = $region3
  $region8: #{einnet_forward.4} parent=0 // loop_exit
    _

</llo_original>
